<compile_context>
chip_gen: v6e
topology: v6e:2x2x1
jax: 0.10.0
libtpu: 0.0.40
codegen_flags: <defaults>
</compile_context>

<pallas_src>
import functools

import jax
import jax.numpy as jnp
from jax.experimental import pallas as pl
from jax.experimental.pallas import tpu as pltpu


def _round_up(x, m):
    return (x + m - 1) // m * m


# ----------------------------------------------------------------------------
# Pass 1 (per branch): seq-sum reduce -> rsample -> per-batch projection bias
# ----------------------------------------------------------------------------
def _rsample_kernel(x_ref, y_ref, mw_ref, mb_ref, vw_ref, vb_ref,
                    eps_ref, wz_ref, wb_ref,
                    bias_ref, kl_ref, acc_ref,
                    *, batch_size, matmul_dtype):
    k = pl.program_id(0)

    @pl.when(k == 0)
    def _():
        acc_ref[...] = jnp.zeros_like(acc_ref)

    # Per-batch sequence sum over this T tile: XLU sublane reduce, no indicator matmul.
    acc_ref[...] += jnp.sum(y_ref[...] - x_ref[...], axis=1)

    @pl.when(k == pl.num_programs(0) - 1)
    def _():
        diff = acc_ref[...]                                          # [B, Hp] f32
        d = diff.astype(matmul_dtype)
        z_mean = jnp.dot(d, mw_ref[...],
                         preferred_element_type=jnp.float32) + mb_ref[...]      # [B, L]
        z_log_var = -jnp.abs(jnp.dot(d, vw_ref[...],
                                     preferred_element_type=jnp.float32) + vb_ref[...])
        kl_ref[0] = (-0.5 * jnp.sum(1.0 + z_log_var - z_mean * z_mean
                                    - jnp.exp(z_log_var)) / batch_size)
        z = z_mean + jnp.exp(0.5 * z_log_var) * eps_ref[...]         # [B, L]
        # Per-batch part of the W_tree / W_graph projection: z @ Wz + b.
        bias_ref[...] = (jnp.dot(z.astype(matmul_dtype), wz_ref[...],
                                 preferred_element_type=jnp.float32) + wb_ref[...])


# ----------------------------------------------------------------------------
# Pass 2 (per branch): row-tiled projection  out = ReLU(x @ Wx + bias_row)
# ----------------------------------------------------------------------------
def _project_kernel(x_ref, wx_ref, bias_ref, o_ref, *, matmul_dtype):
    x = x_ref[0]                                                     # [tT, Hp] f32
    xw = jnp.dot(x.astype(matmul_dtype), wx_ref[...],
                 preferred_element_type=jnp.float32)                 # [tT, Hp]
    o_ref[0] = jnp.maximum(xw + bias_ref[0], 0.0)                    # VPU broadcast add


# ----------------------------------------------------------------------------
# Wrapper
# ----------------------------------------------------------------------------
def _branch(x, y, mw, mb, vw, vb, eps, wcat, wcat_b, matmul_dtype, row_tile):
    B, T, H = x.shape
    L = eps.shape[-1]
    Hp = _round_up(H, 128)
    w_isize = jnp.dtype(matmul_dtype).itemsize

    # Shared T tile: as large as row_tile allows, but capped so the reduce pass's
    # (B, tT, Hp) x/y double-buffered blocks stay within ~24 MiB.
    cap = max(8, ((24 << 20) // max(1, B * Hp * 16)) // 8 * 8)
    tT = max(8, min(row_tile, _round_up(T, 8), cap))
    Tp = _round_up(T, tT)
    n_t = Tp // tT

    pad_th = lambda a: jnp.pad(a, ((0, 0), (0, Tp - T), (0, Hp - H)))
    xp = pad_th(x)
    yp = pad_th(y)

    # Split W_{tree,graph} in the wrapper (free XLA slices) and zero-pad everything to
    # lane-dense 128-multiples.  Matmul operands go to matmul_dtype; biases stay f32.
    wx = jnp.pad(wcat[:H, :], ((0, Hp - H), (0, Hp - H))).astype(matmul_dtype)
    wz = jnp.pad(wcat[H:, :], ((0, 0), (0, Hp - H))).astype(matmul_dtype)
    wb = jnp.pad(wcat_b, ((0, 0), (0, Hp - H)))
    mwp = jnp.pad(mw, ((0, Hp - H), (0, 0))).astype(matmul_dtype)
    vwp = jnp.pad(vw, ((0, Hp - H), (0, 0))).astype(matmul_dtype)

    const = lambda shape: pl.BlockSpec(shape, lambda k, _s=len(shape): (0,) * _s)

    # ------------------ pass 1: reduce + rsample + bias row ------------------
    red_bytes = (4 * B * tT * Hp * 4                       # x,y blocks, double-buffered
                 + 2 * Hp * L * w_isize + L * Hp * w_isize  # mean/var/Wz weights
                 + 4 * B * Hp * 4)                          # acc scratch + bias out
    row_bias, kl = pl.pallas_call(
        functools.partial(_rsample_kernel, batch_size=B, matmul_dtype=matmul_dtype),
        grid=(n_t,),
        in_specs=[pl.BlockSpec((B, tT, Hp), lambda k: (0, k, 0)),
                  pl.BlockSpec((B, tT, Hp), lambda k: (0, k, 0)),
                  const((Hp, L)), const((1, L)),
                  const((Hp, L)), const((1, L)),
                  const((B, L)),
                  const((L, Hp)), const((1, Hp))],
        out_specs=[const((B, Hp)),
                   pl.BlockSpec(memory_space=pltpu.MemorySpace.SMEM)],
        out_shape=[jax.ShapeDtypeStruct((B, Hp), jnp.float32),
                   jax.ShapeDtypeStruct((1,), jnp.float32)],
        scratch_shapes=[pltpu.VMEM((B, Hp), jnp.float32)],
        compiler_params=pltpu.CompilerParams(
            dimension_semantics=("arbitrary",),
            vmem_limit_bytes=int(min(64 << 20, max(32 << 20, 2 * red_bytes)))),
    )(xp, yp, mwp, mb, vwp, vb, eps, wz, wb)

    # ------------------ pass 2: row-tiled projection --------------------------
    bias3 = row_bias.reshape(B, 1, Hp)
    proj_bytes = 4 * tT * Hp * 4 + Hp * Hp * w_isize + B * Hp * 4
    out = pl.pallas_call(
        functools.partial(_project_kernel, matmul_dtype=matmul_dtype),
        grid=(B, n_t),
        in_specs=[pl.BlockSpec((1, tT, Hp), lambda b, t: (b, t, 0)),
                  pl.BlockSpec((Hp, Hp), lambda b, t: (0, 0)),     # resident weights
                  pl.BlockSpec((1, 1, Hp), lambda b, t: (b, 0, 0))],
        out_specs=pl.BlockSpec((1, tT, Hp), lambda b, t: (b, t, 0)),
        out_shape=jax.ShapeDtypeStruct((B, Tp, Hp), jnp.float32),
        compiler_params=pltpu.CompilerParams(
            dimension_semantics=("parallel", "parallel"),          # 2x on v7x (2 TCs)
            vmem_limit_bytes=int(min(64 << 20, max(32 << 20, 2 * proj_bytes)))),
    )(xp, wx, bias3)

    return out[:, :T, :H], kl[0]


@functools.partial(jax.jit, static_argnames=("matmul_dtype", "row_tile"))
def hier_vgnn_forward(params, x_tree, x_graph, y_tree, y_graph,
                      eps_tree, eps_graph,
                      matmul_dtype=jnp.float32, row_tile=512):
    """Returns (z_tree_vecs, z_graph_vecs, kl_div) -- what forward() feeds the decoder
    plus the beta-weighted KL term."""
    zt, kl_t = _branch(x_tree, y_tree,
                       params['Tm_w'], params['Tm_b'], params['Tv_w'], params['Tv_b'],
                       eps_tree, params['Wt_w'], params['Wt_b'],
                       matmul_dtype, row_tile)
    zg, kl_g = _branch(x_graph, y_graph,
                       params['Gm_w'], params['Gm_b'], params['Gv_w'], params['Gv_b'],
                       eps_graph, params['Wg_w'], params['Wg_b'],
                       matmul_dtype, row_tile)
    return zt, zg, kl_t + kl_g


# ----------------------------------------------------------------------------
# Pure-JAX reference (mirrors the PyTorch HierVGNN.forward line by line)
# ----------------------------------------------------------------------------
def _ref_forward(params, x_tree, x_graph, y_tree, y_graph, eps_tree, eps_graph):
    def lin(x, w, b):
        return x @ w + b

    def rsample(z, mw, mb, vw, vb, eps):
        B = z.shape[0]
        z_mean = lin(z, mw, mb)
        z_log_var = -jnp.abs(lin(z, vw, vb))
        kl = -0.5 * jnp.sum(1.0 + z_log_var - z_mean * z_mean - jnp.exp(z_log_var)) / B
        return z_mean + jnp.exp(z_log_var / 2) * eps, kl

    dt = y_tree.sum(1) - x_tree.sum(1)
    dg = y_graph.sum(1) - x_graph.sum(1)
    dt, kl_t = rsample(dt, params['Tm_w'], params['Tm_b'],
                       params['Tv_w'], params['Tv_b'], eps_tree)
    dg, kl_g = rsample(dg, params['Gm_w'], params['Gm_b'],
                       params['Gv_w'], params['Gv_b'], eps_graph)
    dt = jnp.broadcast_to(dt[:, None, :], (x_tree.shape[0], x_tree.shape[1], dt.shape[-1]))
    dg = jnp.broadcast_to(dg[:, None, :], (x_graph.shape[0], x_graph.shape[1], dg.shape[-1]))
    zt = jax.nn.relu(lin(jnp.concatenate([x_tree, dt], -1), params['Wt_w'], params['Wt_b']))
    zg = jax.nn.relu(lin(jnp.concatenate([x_graph, dg], -1), params['Wg_w'], params['Wg_b']))
    return zt, zg, kl_t + kl_g


# ----------------------------------------------------------------------------
# Deterministic parameter init + example run
# ----------------------------------------------------------------------------
def _init_params(key, H, L):
    ks = jax.random.split(key, 12)

    def lin_init(kw, kb, fan_in, fan_out):
        bound = float(fan_in) ** -0.5
        w = jax.random.uniform(kw, (fan_in, fan_out), jnp.float32, -bound, bound)
        b = jax.random.uniform(kb, (1, fan_out), jnp.float32, -bound, bound)
        return w, b

    p = {}
    p['Tm_w'], p['Tm_b'] = lin_init(ks[0], ks[1], H, L)        # T_mean
    p['Tv_w'], p['Tv_b'] = lin_init(ks[2], ks[3], H, L)        # T_var
    p['Gm_w'], p['Gm_b'] = lin_init(ks[4], ks[5], H, L)        # G_mean
    p['Gv_w'], p['Gv_b'] = lin_init(ks[6], ks[7], H, L)        # G_var
    p['Wt_w'], p['Wt_b'] = lin_init(ks[8], ks[9], H + L, H)    # W_tree
    p['Wg_w'], p['Wg_b'] = lin_init(ks[10], ks[11], H + L, H)  # W_graph
    return p


if __name__ == "__main__":
    B, T_tree, T_graph = 2, 8, 12
    H, L = 32, 16                                 # hidden_size, latent_size

    root = jax.random.PRNGKey(0)
    k = jax.random.split(root, 8)
    x_tree = jax.random.normal(k[0], (B, T_tree, H), jnp.float32)
    x_graph = jax.random.normal(k[1], (B, T_graph, H), jnp.float32)
    y_tree = jax.random.normal(k[2], (B, T_tree, H), jnp.float32)
    y_graph = jax.random.normal(k[3], (B, T_graph, H), jnp.float32)
    eps_tree = jax.random.normal(k[4], (B, L), jnp.float32)    # rsample epsilon (deterministic)
    eps_graph = jax.random.normal(k[5], (B, L), jnp.float32)
    params = _init_params(k[6], H, L)

    zt_r, zg_r, kl_r = _ref_forward(params, x_tree, x_graph, y_tree, y_graph,
                                    eps_tree, eps_graph)

    # f32 MXU operands: tight check against the f32 reference.
    zt, zg, kl = hier_vgnn_forward(params, x_tree, x_graph, y_tree, y_graph,
                                   eps_tree, eps_graph,
                                   matmul_dtype=jnp.float32, row_tile=512)
    jax.block_until_ready((zt, zg, kl))
    assert zt.shape == (B, T_tree, H) and zg.shape == (B, T_graph, H)
    assert jnp.allclose(zt, zt_r, atol=1e-4, rtol=1e-4)
    assert jnp.allclose(zg, zg_r, atol=1e-4, rtol=1e-4)
    assert jnp.allclose(kl, kl_r, atol=1e-4, rtol=1e-4)

    # bf16 MXU operands (production path on v5e/v6e/v7x): loose check only.
    zt_b, zg_b, kl_b = hier_vgnn_forward(params, x_tree, x_graph, y_tree, y_graph,
                                         eps_tree, eps_graph,
                                         matmul_dtype=jnp.bfloat16, row_tile=512)
    jax.block_until_ready((zt_b, zg_b, kl_b))
    assert jnp.allclose(zt_b, zt_r, atol=5e-2, rtol=5e-2)
    assert jnp.allclose(zg_b, zg_r, atol=5e-2, rtol=5e-2)
    assert jnp.allclose(kl_b, kl_r, atol=2e-1, rtol=5e-2)

    print("KERNEL_OK")
</pallas_src>

<mosaic_0001>
module attributes {stable_mosaic.version = 11 : i64} {
  func.func @_rsample_kernel(%arg0: i32, %arg1: memref<2x16x128xf32, #tpu.memory_space<vmem>>, %arg2: memref<2x16x128xf32, #tpu.memory_space<vmem>>, %arg3: memref<128x16xf32, #tpu.memory_space<vmem>>, %arg4: memref<1x16xf32, #tpu.memory_space<vmem>>, %arg5: memref<128x16xf32, #tpu.memory_space<vmem>>, %arg6: memref<1x16xf32, #tpu.memory_space<vmem>>, %arg7: memref<2x16xf32, #tpu.memory_space<vmem>>, %arg8: memref<16x128xf32, #tpu.memory_space<vmem>>, %arg9: memref<1x128xf32, #tpu.memory_space<vmem>>, %arg10: memref<2x128xf32, #tpu.memory_space<vmem>>, %arg11: memref<1xf32, #tpu.memory_space<smem>>, %arg12: memref<2x128xf32, #tpu.memory_space<vmem>>) attributes {dimension_semantics = [#tpu.dimension_semantics<arbitrary>], iteration_bounds = array<i64: 1>, scalar_prefetch = 0 : i64, scratch_operands = 1 : i64, tpu.core_type = #tpu.core_type<tc>, window_params = [{transform_indices = @transform_0, window_bounds = array<i64: 2, 16, 128>}, {transform_indices = @transform_1, window_bounds = array<i64: 2, 16, 128>}, {pipeline_mode = #tpu.pipeline_mode<synchronous>, transform_indices = @transform_2, window_bounds = array<i64: 128, 16>}, {pipeline_mode = #tpu.pipeline_mode<synchronous>, transform_indices = @transform_3, window_bounds = array<i64: 1, 16>}, {pipeline_mode = #tpu.pipeline_mode<synchronous>, transform_indices = @transform_4, window_bounds = array<i64: 128, 16>}, {pipeline_mode = #tpu.pipeline_mode<synchronous>, transform_indices = @transform_5, window_bounds = array<i64: 1, 16>}, {pipeline_mode = #tpu.pipeline_mode<synchronous>, transform_indices = @transform_6, window_bounds = array<i64: 2, 16>}, {pipeline_mode = #tpu.pipeline_mode<synchronous>, transform_indices = @transform_7, window_bounds = array<i64: 16, 128>}, {pipeline_mode = #tpu.pipeline_mode<synchronous>, transform_indices = @transform_8, window_bounds = array<i64: 1, 128>}, {pipeline_mode = #tpu.pipeline_mode<synchronous>, transform_indices = @transform_9, window_bounds = array<i64: 2, 128>}, {transform_indices = @transform_10, window_bounds = array<i64: 1>}]} {
    %c0_i32 = arith.constant 0 : i32
    %0 = arith.cmpi eq, %arg0, %c0_i32 : i32
    %1 = arith.extui %0 : i1 to i32
    %c0_i32_0 = arith.constant 0 : i32
    %2 = arith.cmpi ne, %1, %c0_i32_0 : i32
    scf.if %2 {
      %cst_12 = arith.constant 0.000000e+00 : f32
      %13 = vector.broadcast %cst_12 : f32 to vector<2x128xf32>
      %c0_13 = arith.constant 0 : index
      %c0_14 = arith.constant 0 : index
      %14 = vector.load %arg12[%c0_13, %c0_14] : memref<2x128xf32, #tpu.memory_space<vmem>>, vector<2x128xf32>
      tpu.vector_store %arg12[%c0_13, %c0_14], %13 {strides = array<i32>} : memref<2x128xf32, #tpu.memory_space<vmem>>, vector<2x128xf32>,
    } else {
    }
    %c0 = arith.constant 0 : index
    %c0_1 = arith.constant 0 : index
    %3 = vector.load %arg12[%c0, %c0_1] : memref<2x128xf32, #tpu.memory_space<vmem>>, vector<2x128xf32>
    %c0_2 = arith.constant 0 : index
    %c0_3 = arith.constant 0 : index
    %c0_4 = arith.constant 0 : index
    %4 = vector.load %arg2[%c0_2, %c0_3, %c0_4] : memref<2x16x128xf32, #tpu.memory_space<vmem>>, vector<2x16x128xf32>
    %c0_5 = arith.constant 0 : index
    %c0_6 = arith.constant 0 : index
    %c0_7 = arith.constant 0 : index
    %5 = vector.load %arg1[%c0_5, %c0_6, %c0_7] : memref<2x16x128xf32, #tpu.memory_space<vmem>>, vector<2x16x128xf32>
    %6 = arith.subf %4, %5 : vector<2x16x128xf32>
    %cst = arith.constant dense<0.000000e+00> : vector<2x128xf32>
    %7 = vector.multi_reduction <add>, %6, %cst [1] : vector<2x16x128xf32> to vector<2x128xf32>
    %8 = arith.addf %3, %7 : vector<2x128xf32>
    %c0_8 = arith.constant 0 : index
    %c0_9 = arith.constant 0 : index
    %9 = vector.load %arg12[%c0_8, %c0_9] : memref<2x128xf32, #tpu.memory_space<vmem>>, vector<2x128xf32>
    tpu.vector_store %arg12[%c0_8, %c0_9], %8 {strides = array<i32>} : memref<2x128xf32, #tpu.memory_space<vmem>>, vector<2x128xf32>,
    %c0_i32_10 = arith.constant 0 : i32
    %10 = arith.cmpi eq, %arg0, %c0_i32_10 : i32
    %11 = arith.extui %10 : i1 to i32
    %c0_i32_11 = arith.constant 0 : i32
    %12 = arith.cmpi ne, %11, %c0_i32_11 : i32
    scf.if %12 {
      %c0_12 = arith.constant 0 : index
      %c0_13 = arith.constant 0 : index
      %13 = vector.load %arg12[%c0_12, %c0_13] : memref<2x128xf32, #tpu.memory_space<vmem>>, vector<2x128xf32>
      %c0_14 = arith.constant 0 : index
      %c0_15 = arith.constant 0 : index
      %14 = vector.load %arg3[%c0_14, %c0_15] : memref<128x16xf32, #tpu.memory_space<vmem>>, vector<128x16xf32>
      %cst_16 = arith.constant dense<0.000000e+00> : vector<2x16xf32>
      %15 = tpu.matmul %13, %14, %cst_16 {dimension_numbers = #tpu.dot_dimension_numbers<[1], [0], [0], [1], [0, 0, 1, 1], [], []>} : vector<2x128xf32>, vector<128x16xf32>, vector<2x16xf32> -> vector<2x16xf32>
      %c0_17 = arith.constant 0 : index
      %c0_18 = arith.constant 0 : index
      %16 = vector.load %arg4[%c0_17, %c0_18] : memref<1x16xf32, #tpu.memory_space<vmem>>, vector<1x16xf32>
      %17 = vector.broadcast %16 : vector<1x16xf32> to vector<2x16xf32>
      %18 = arith.addf %15, %17 : vector<2x16xf32>
      %c0_19 = arith.constant 0 : index
      %c0_20 = arith.constant 0 : index
      %19 = vector.load %arg5[%c0_19, %c0_20] : memref<128x16xf32, #tpu.memory_space<vmem>>, vector<128x16xf32>
      %cst_21 = arith.constant dense<0.000000e+00> : vector<2x16xf32>
      %20 = tpu.matmul %13, %19, %cst_21 {dimension_numbers = #tpu.dot_dimension_numbers<[1], [0], [0], [1], [0, 0, 1, 1], [], []>} : vector<2x128xf32>, vector<128x16xf32>, vector<2x16xf32> -> vector<2x16xf32>
      %c0_22 = arith.constant 0 : index
      %c0_23 = arith.constant 0 : index
      %21 = vector.load %arg6[%c0_22, %c0_23] : memref<1x16xf32, #tpu.memory_space<vmem>>, vector<1x16xf32>
      %22 = vector.broadcast %21 : vector<1x16xf32> to vector<2x16xf32>
      %23 = arith.addf %20, %22 : vector<2x16xf32>
      %24 = math.absf %23 : vector<2x16xf32>
      %cst_24 = arith.constant 0.000000e+00 : f32
      %25 = vector.broadcast %cst_24 : f32 to vector<2x16xf32>
      %26 = arith.subf %25, %24 : vector<2x16xf32>
      %cst_25 = arith.constant 1.000000e+00 : f32
      %27 = vector.broadcast %cst_25 : f32 to vector<2x16xf32>
      %28 = arith.addf %27, %26 : vector<2x16xf32>
      %29 = arith.mulf %18, %18 : vector<2x16xf32>
      %30 = arith.subf %28, %29 : vector<2x16xf32>
      %31 = math.exp %26 : vector<2x16xf32>
      %32 = arith.subf %30, %31 : vector<2x16xf32>
      %33 = vector.shape_cast %32 : vector<2x16xf32> to vector<1x2x16xf32>
      %cst_26 = arith.constant dense<0.000000e+00> : vector<1xf32>
      %34 = vector.multi_reduction <add>, %33, %cst_26 [1, 2] : vector<1x2x16xf32> to vector<1xf32>
      %35 = vector.shape_cast %34 : vector<1xf32> to vector<1x1x1xf32>
      %36 = vector.extract %35[0, 0, 0] : f32 from vector<1x1x1xf32>
      %cst_27 = arith.constant -5.000000e-01 : f32
      %37 = arith.mulf %cst_27, %36 : f32
      %cst_28 = arith.constant 2.000000e+00 : f32
      %38 = arith.divf %37, %cst_28 : f32
      %c0_29 = arith.constant 0 : index
      %39 = memref.load %arg11[%c0_29] : memref<1xf32, #tpu.memory_space<smem>>
      memref.store %38, %arg11[%c0_29] : memref<1xf32, #tpu.memory_space<smem>>
      %cst_30 = arith.constant 5.000000e-01 : f32
      %40 = vector.broadcast %cst_30 : f32 to vector<2x16xf32>
      %41 = arith.mulf %40, %26 : vector<2x16xf32>
      %42 = math.exp %41 : vector<2x16xf32>
      %c0_31 = arith.constant 0 : index
      %c0_32 = arith.constant 0 : index
      %43 = vector.load %arg7[%c0_31, %c0_32] : memref<2x16xf32, #tpu.memory_space<vmem>>, vector<2x16xf32>
      %44 = arith.mulf %42, %43 : vector<2x16xf32>
      %45 = arith.addf %18, %44 : vector<2x16xf32>
      %c0_33 = arith.constant 0 : index
      %c0_34 = arith.constant 0 : index
      %46 = vector.load %arg8[%c0_33, %c0_34] : memref<16x128xf32, #tpu.memory_space<vmem>>, vector<16x128xf32>
      %cst_35 = arith.constant dense<0.000000e+00> : vector<2x128xf32>
      %47 = tpu.matmul %45, %46, %cst_35 {dimension_numbers = #tpu.dot_dimension_numbers<[1], [0], [0], [1], [0, 0, 1, 1], [], []>} : vector<2x16xf32>, vector<16x128xf32>, vector<2x128xf32> -> vector<2x128xf32>
      %c0_36 = arith.constant 0 : index
      %c0_37 = arith.constant 0 : index
      %48 = vector.load %arg9[%c0_36, %c0_37] : memref<1x128xf32, #tpu.memory_space<vmem>>, vector<1x128xf32>
      %49 = vector.broadcast %48 : vector<1x128xf32> to vector<2x128xf32>
      %50 = arith.addf %47, %49 : vector<2x128xf32>
      %c0_38 = arith.constant 0 : index
      %c0_39 = arith.constant 0 : index
      %51 = vector.load %arg10[%c0_38, %c0_39] : memref<2x128xf32, #tpu.memory_space<vmem>>, vector<2x128xf32>
      tpu.vector_store %arg10[%c0_38, %c0_39], %50 {strides = array<i32>} : memref<2x128xf32, #tpu.memory_space<vmem>>, vector<2x128xf32>,
    } else {
    }
    return
  }
  func.func @transform_0(%arg0: i32) -> (i32, i32, i32) {
    %c0_i32 = arith.constant 0 : i32
    %c0_i32_0 = arith.constant 0 : i32
    %c0_i32_1 = arith.constant 0 : i32
    return %c0_i32, %arg0, %c0_i32_0 : i32, i32, i32
  }
  func.func @transform_1(%arg0: i32) -> (i32, i32, i32) {
    %c0_i32 = arith.constant 0 : i32
    %c0_i32_0 = arith.constant 0 : i32
    %c0_i32_1 = arith.constant 0 : i32
    return %c0_i32, %arg0, %c0_i32_0 : i32, i32, i32
  }
  func.func @transform_2(%arg0: i32) -> (i32, i32) {
    %c0_i32 = arith.constant 0 : i32
    %c0_i32_0 = arith.constant 0 : i32
    %c0_i32_1 = arith.constant 0 : i32
    return %c0_i32, %c0_i32_0 : i32, i32
  }
  func.func @transform_3(%arg0: i32) -> (i32, i32) {
    %c0_i32 = arith.constant 0 : i32
    %c0_i32_0 = arith.constant 0 : i32
    %c0_i32_1 = arith.constant 0 : i32
    return %c0_i32, %c0_i32_0 : i32, i32
  }
  func.func @transform_4(%arg0: i32) -> (i32, i32) {
    %c0_i32 = arith.constant 0 : i32
    %c0_i32_0 = arith.constant 0 : i32
    %c0_i32_1 = arith.constant 0 : i32
    return %c0_i32, %c0_i32_0 : i32, i32
  }
  func.func @transform_5(%arg0: i32) -> (i32, i32) {
    %c0_i32 = arith.constant 0 : i32
    %c0_i32_0 = arith.constant 0 : i32
    %c0_i32_1 = arith.constant 0 : i32
    return %c0_i32, %c0_i32_0 : i32, i32
  }
  func.func @transform_6(%arg0: i32) -> (i32, i32) {
    %c0_i32 = arith.constant 0 : i32
    %c0_i32_0 = arith.constant 0 : i32
    %c0_i32_1 = arith.constant 0 : i32
    return %c0_i32, %c0_i32_0 : i32, i32
  }
  func.func @transform_7(%arg0: i32) -> (i32, i32) {
    %c0_i32 = arith.constant 0 : i32
    %c0_i32_0 = arith.constant 0 : i32
    %c0_i32_1 = arith.constant 0 : i32
    return %c0_i32, %c0_i32_0 : i32, i32
  }
  func.func @transform_8(%arg0: i32) -> (i32, i32) {
    %c0_i32 = arith.constant 0 : i32
    %c0_i32_0 = arith.constant 0 : i32
    %c0_i32_1 = arith.constant 0 : i32
    return %c0_i32, %c0_i32_0 : i32, i32
  }
  func.func @transform_9(%arg0: i32) -> (i32, i32) {
    %c0_i32 = arith.constant 0 : i32
    %c0_i32_0 = arith.constant 0 : i32
    %c0_i32_1 = arith.constant 0 : i32
    return %c0_i32, %c0_i32_0 : i32, i32
  }
  func.func @transform_10(%arg0: i32) -> i32 {
    %c0_i32 = arith.constant 0 : i32
    %c0_i32_0 = arith.constant 0 : i32
    return %c0_i32 : i32
  }
}

module attributes {stable_mosaic.version = 11 : i64} {
  func.func @_rsample_kernel(%arg0: i32, %arg1: memref<2x8x128xf32, #tpu.memory_space<vmem>>, %arg2: memref<2x8x128xf32, #tpu.memory_space<vmem>>, %arg3: memref<128x16xf32, #tpu.memory_space<vmem>>, %arg4: memref<1x16xf32, #tpu.memory_space<vmem>>, %arg5: memref<128x16xf32, #tpu.memory_space<vmem>>, %arg6: memref<1x16xf32, #tpu.memory_space<vmem>>, %arg7: memref<2x16xf32, #tpu.memory_space<vmem>>, %arg8: memref<16x128xf32, #tpu.memory_space<vmem>>, %arg9: memref<1x128xf32, #tpu.memory_space<vmem>>, %arg10: memref<2x128xf32, #tpu.memory_space<vmem>>, %arg11: memref<1xf32, #tpu.memory_space<smem>>, %arg12: memref<2x128xf32, #tpu.memory_space<vmem>>) attributes {dimension_semantics = [#tpu.dimension_semantics<arbitrary>], iteration_bounds = array<i64: 1>, scalar_prefetch = 0 : i64, scratch_operands = 1 : i64, tpu.core_type = #tpu.core_type<tc>, window_params = [{transform_indices = @transform_0, window_bounds = array<i64: 2, 8, 128>}, {transform_indices = @transform_1, window_bounds = array<i64: 2, 8, 128>}, {pipeline_mode = #tpu.pipeline_mode<synchronous>, transform_indices = @transform_2, window_bounds = array<i64: 128, 16>}, {pipeline_mode = #tpu.pipeline_mode<synchronous>, transform_indices = @transform_3, window_bounds = array<i64: 1, 16>}, {pipeline_mode = #tpu.pipeline_mode<synchronous>, transform_indices = @transform_4, window_bounds = array<i64: 128, 16>}, {pipeline_mode = #tpu.pipeline_mode<synchronous>, transform_indices = @transform_5, window_bounds = array<i64: 1, 16>}, {pipeline_mode = #tpu.pipeline_mode<synchronous>, transform_indices = @transform_6, window_bounds = array<i64: 2, 16>}, {pipeline_mode = #tpu.pipeline_mode<synchronous>, transform_indices = @transform_7, window_bounds = array<i64: 16, 128>}, {pipeline_mode = #tpu.pipeline_mode<synchronous>, transform_indices = @transform_8, window_bounds = array<i64: 1, 128>}, {pipeline_mode = #tpu.pipeline_mode<synchronous>, transform_indices = @transform_9, window_bounds = array<i64: 2, 128>}, {transform_indices = @transform_10, window_bounds = array<i64: 1>}]} {
    %c0_i32 = arith.constant 0 : i32
    %0 = arith.cmpi eq, %arg0, %c0_i32 : i32
    %1 = arith.extui %0 : i1 to i32
    %c0_i32_0 = arith.constant 0 : i32
    %2 = arith.cmpi ne, %1, %c0_i32_0 : i32
    scf.if %2 {
      %cst_12 = arith.constant 0.000000e+00 : f32
      %13 = vector.broadcast %cst_12 : f32 to vector<2x128xf32>
      %c0_13 = arith.constant 0 : index
      %c0_14 = arith.constant 0 : index
      %14 = vector.load %arg12[%c0_13, %c0_14] : memref<2x128xf32, #tpu.memory_space<vmem>>, vector<2x128xf32>
      tpu.vector_store %arg12[%c0_13, %c0_14], %13 {strides = array<i32>} : memref<2x128xf32, #tpu.memory_space<vmem>>, vector<2x128xf32>,
    } else {
    }
    %c0 = arith.constant 0 : index
    %c0_1 = arith.constant 0 : index
    %3 = vector.load %arg12[%c0, %c0_1] : memref<2x128xf32, #tpu.memory_space<vmem>>, vector<2x128xf32>
    %c0_2 = arith.constant 0 : index
    %c0_3 = arith.constant 0 : index
    %c0_4 = arith.constant 0 : index
    %4 = vector.load %arg2[%c0_2, %c0_3, %c0_4] : memref<2x8x128xf32, #tpu.memory_space<vmem>>, vector<2x8x128xf32>
    %c0_5 = arith.constant 0 : index
    %c0_6 = arith.constant 0 : index
    %c0_7 = arith.constant 0 : index
    %5 = vector.load %arg1[%c0_5, %c0_6, %c0_7] : memref<2x8x128xf32, #tpu.memory_space<vmem>>, vector<2x8x128xf32>
    %6 = arith.subf %4, %5 : vector<2x8x128xf32>
    %cst = arith.constant dense<0.000000e+00> : vector<2x128xf32>
    %7 = vector.multi_reduction <add>, %6, %cst [1] : vector<2x8x128xf32> to vector<2x128xf32>
    %8 = arith.addf %3, %7 : vector<2x128xf32>
    %c0_8 = arith.constant 0 : index
    %c0_9 = arith.constant 0 : index
    %9 = vector.load %arg12[%c0_8, %c0_9] : memref<2x128xf32, #tpu.memory_space<vmem>>, vector<2x128xf32>
    tpu.vector_store %arg12[%c0_8, %c0_9], %8 {strides = array<i32>} : memref<2x128xf32, #tpu.memory_space<vmem>>, vector<2x128xf32>,
    %c0_i32_10 = arith.constant 0 : i32
    %10 = arith.cmpi eq, %arg0, %c0_i32_10 : i32
    %11 = arith.extui %10 : i1 to i32
    %c0_i32_11 = arith.constant 0 : i32
    %12 = arith.cmpi ne, %11, %c0_i32_11 : i32
    scf.if %12 {
      %c0_12 = arith.constant 0 : index
      %c0_13 = arith.constant 0 : index
      %13 = vector.load %arg12[%c0_12, %c0_13] : memref<2x128xf32, #tpu.memory_space<vmem>>, vector<2x128xf32>
      %c0_14 = arith.constant 0 : index
      %c0_15 = arith.constant 0 : index
      %14 = vector.load %arg3[%c0_14, %c0_15] : memref<128x16xf32, #tpu.memory_space<vmem>>, vector<128x16xf32>
      %cst_16 = arith.constant dense<0.000000e+00> : vector<2x16xf32>
      %15 = tpu.matmul %13, %14, %cst_16 {dimension_numbers = #tpu.dot_dimension_numbers<[1], [0], [0], [1], [0, 0, 1, 1], [], []>} : vector<2x128xf32>, vector<128x16xf32>, vector<2x16xf32> -> vector<2x16xf32>
      %c0_17 = arith.constant 0 : index
      %c0_18 = arith.constant 0 : index
      %16 = vector.load %arg4[%c0_17, %c0_18] : memref<1x16xf32, #tpu.memory_space<vmem>>, vector<1x16xf32>
      %17 = vector.broadcast %16 : vector<1x16xf32> to vector<2x16xf32>
      %18 = arith.addf %15, %17 : vector<2x16xf32>
      %c0_19 = arith.constant 0 : index
      %c0_20 = arith.constant 0 : index
      %19 = vector.load %arg5[%c0_19, %c0_20] : memref<128x16xf32, #tpu.memory_space<vmem>>, vector<128x16xf32>
      %cst_21 = arith.constant dense<0.000000e+00> : vector<2x16xf32>
      %20 = tpu.matmul %13, %19, %cst_21 {dimension_numbers = #tpu.dot_dimension_numbers<[1], [0], [0], [1], [0, 0, 1, 1], [], []>} : vector<2x128xf32>, vector<128x16xf32>, vector<2x16xf32> -> vector<2x16xf32>
      %c0_22 = arith.constant 0 : index
      %c0_23 = arith.constant 0 : index
      %21 = vector.load %arg6[%c0_22, %c0_23] : memref<1x16xf32, #tpu.memory_space<vmem>>, vector<1x16xf32>
      %22 = vector.broadcast %21 : vector<1x16xf32> to vector<2x16xf32>
      %23 = arith.addf %20, %22 : vector<2x16xf32>
      %24 = math.absf %23 : vector<2x16xf32>
      %cst_24 = arith.constant 0.000000e+00 : f32
      %25 = vector.broadcast %cst_24 : f32 to vector<2x16xf32>
      %26 = arith.subf %25, %24 : vector<2x16xf32>
      %cst_25 = arith.constant 1.000000e+00 : f32
      %27 = vector.broadcast %cst_25 : f32 to vector<2x16xf32>
      %28 = arith.addf %27, %26 : vector<2x16xf32>
      %29 = arith.mulf %18, %18 : vector<2x16xf32>
      %30 = arith.subf %28, %29 : vector<2x16xf32>
      %31 = math.exp %26 : vector<2x16xf32>
      %32 = arith.subf %30, %31 : vector<2x16xf32>
      %33 = vector.shape_cast %32 : vector<2x16xf32> to vector<1x2x16xf32>
      %cst_26 = arith.constant dense<0.000000e+00> : vector<1xf32>
      %34 = vector.multi_reduction <add>, %33, %cst_26 [1, 2] : vector<1x2x16xf32> to vector<1xf32>
      %35 = vector.shape_cast %34 : vector<1xf32> to vector<1x1x1xf32>
      %36 = vector.extract %35[0, 0, 0] : f32 from vector<1x1x1xf32>
      %cst_27 = arith.constant -5.000000e-01 : f32
      %37 = arith.mulf %cst_27, %36 : f32
      %cst_28 = arith.constant 2.000000e+00 : f32
      %38 = arith.divf %37, %cst_28 : f32
      %c0_29 = arith.constant 0 : index
      %39 = memref.load %arg11[%c0_29] : memref<1xf32, #tpu.memory_space<smem>>
      memref.store %38, %arg11[%c0_29] : memref<1xf32, #tpu.memory_space<smem>>
      %cst_30 = arith.constant 5.000000e-01 : f32
      %40 = vector.broadcast %cst_30 : f32 to vector<2x16xf32>
      %41 = arith.mulf %40, %26 : vector<2x16xf32>
      %42 = math.exp %41 : vector<2x16xf32>
      %c0_31 = arith.constant 0 : index
      %c0_32 = arith.constant 0 : index
      %43 = vector.load %arg7[%c0_31, %c0_32] : memref<2x16xf32, #tpu.memory_space<vmem>>, vector<2x16xf32>
      %44 = arith.mulf %42, %43 : vector<2x16xf32>
      %45 = arith.addf %18, %44 : vector<2x16xf32>
      %c0_33 = arith.constant 0 : index
      %c0_34 = arith.constant 0 : index
      %46 = vector.load %arg8[%c0_33, %c0_34] : memref<16x128xf32, #tpu.memory_space<vmem>>, vector<16x128xf32>
      %cst_35 = arith.constant dense<0.000000e+00> : vector<2x128xf32>
      %47 = tpu.matmul %45, %46, %cst_35 {dimension_numbers = #tpu.dot_dimension_numbers<[1], [0], [0], [1], [0, 0, 1, 1], [], []>} : vector<2x16xf32>, vector<16x128xf32>, vector<2x128xf32> -> vector<2x128xf32>
      %c0_36 = arith.constant 0 : index
      %c0_37 = arith.constant 0 : index
      %48 = vector.load %arg9[%c0_36, %c0_37] : memref<1x128xf32, #tpu.memory_space<vmem>>, vector<1x128xf32>
      %49 = vector.broadcast %48 : vector<1x128xf32> to vector<2x128xf32>
      %50 = arith.addf %47, %49 : vector<2x128xf32>
      %c0_38 = arith.constant 0 : index
      %c0_39 = arith.constant 0 : index
      %51 = vector.load %arg10[%c0_38, %c0_39] : memref<2x128xf32, #tpu.memory_space<vmem>>, vector<2x128xf32>
      tpu.vector_store %arg10[%c0_38, %c0_39], %50 {strides = array<i32>} : memref<2x128xf32, #tpu.memory_space<vmem>>, vector<2x128xf32>,
    } else {
    }
    return
  }
  func.func @transform_0(%arg0: i32) -> (i32, i32, i32) {
    %c0_i32 = arith.constant 0 : i32
    %c0_i32_0 = arith.constant 0 : i32
    %c0_i32_1 = arith.constant 0 : i32
    return %c0_i32, %arg0, %c0_i32_0 : i32, i32, i32
  }
  func.func @transform_1(%arg0: i32) -> (i32, i32, i32) {
    %c0_i32 = arith.constant 0 : i32
    %c0_i32_0 = arith.constant 0 : i32
    %c0_i32_1 = arith.constant 0 : i32
    return %c0_i32, %arg0, %c0_i32_0 : i32, i32, i32
  }
  func.func @transform_2(%arg0: i32) -> (i32, i32) {
    %c0_i32 = arith.constant 0 : i32
    %c0_i32_0 = arith.constant 0 : i32
    %c0_i32_1 = arith.constant 0 : i32
    return %c0_i32, %c0_i32_0 : i32, i32
  }
  func.func @transform_3(%arg0: i32) -> (i32, i32) {
    %c0_i32 = arith.constant 0 : i32
    %c0_i32_0 = arith.constant 0 : i32
    %c0_i32_1 = arith.constant 0 : i32
    return %c0_i32, %c0_i32_0 : i32, i32
  }
  func.func @transform_4(%arg0: i32) -> (i32, i32) {
    %c0_i32 = arith.constant 0 : i32
    %c0_i32_0 = arith.constant 0 : i32
    %c0_i32_1 = arith.constant 0 : i32
    return %c0_i32, %c0_i32_0 : i32, i32
  }
  func.func @transform_5(%arg0: i32) -> (i32, i32) {
    %c0_i32 = arith.constant 0 : i32
    %c0_i32_0 = arith.constant 0 : i32
    %c0_i32_1 = arith.constant 0 : i32
    return %c0_i32, %c0_i32_0 : i32, i32
  }
  func.func @transform_6(%arg0: i32) -> (i32, i32) {
    %c0_i32 = arith.constant 0 : i32
    %c0_i32_0 = arith.constant 0 : i32
    %c0_i32_1 = arith.constant 0 : i32
    return %c0_i32, %c0_i32_0 : i32, i32
  }
  func.func @transform_7(%arg0: i32) -> (i32, i32) {
    %c0_i32 = arith.constant 0 : i32
    %c0_i32_0 = arith.constant 0 : i32
    %c0_i32_1 = arith.constant 0 : i32
    return %c0_i32, %c0_i32_0 : i32, i32
  }
  func.func @transform_8(%arg0: i32) -> (i32, i32) {
    %c0_i32 = arith.constant 0 : i32
    %c0_i32_0 = arith.constant 0 : i32
    %c0_i32_1 = arith.constant 0 : i32
    return %c0_i32, %c0_i32_0 : i32, i32
  }
  func.func @transform_9(%arg0: i32) -> (i32, i32) {
    %c0_i32 = arith.constant 0 : i32
    %c0_i32_0 = arith.constant 0 : i32
    %c0_i32_1 = arith.constant 0 : i32
    return %c0_i32, %c0_i32_0 : i32, i32
  }
  func.func @transform_10(%arg0: i32) -> i32 {
    %c0_i32 = arith.constant 0 : i32
    %c0_i32_0 = arith.constant 0 : i32
    return %c0_i32 : i32
  }
}

module attributes {stable_mosaic.version = 11 : i64} {
  func.func @_project_kernel(%arg0: i32, %arg1: i32, %arg2: memref<1x16x128xf32, #tpu.memory_space<vmem>>, %arg3: memref<128x128xf32, #tpu.memory_space<vmem>>, %arg4: memref<1x1x128xf32, #tpu.memory_space<vmem>>, %arg5: memref<1x16x128xf32, #tpu.memory_space<vmem>>) attributes {dimension_semantics = [#tpu.dimension_semantics<parallel>, #tpu.dimension_semantics<parallel>], iteration_bounds = array<i64: 2, 1>, scalar_prefetch = 0 : i64, scratch_operands = 0 : i64, tpu.core_type = #tpu.core_type<tc>, window_params = [{transform_indices = @transform_0, window_bounds = array<i64: 1, 16, 128>}, {pipeline_mode = #tpu.pipeline_mode<synchronous>, transform_indices = @transform_1, window_bounds = array<i64: 128, 128>}, {transform_indices = @transform_2, window_bounds = array<i64: 1, 1, 128>}, {transform_indices = @transform_3, window_bounds = array<i64: 1, 16, 128>}]} {
    %c0 = arith.constant 0 : index
    %c0_0 = arith.constant 0 : index
    %c0_1 = arith.constant 0 : index
    %0 = vector.load %arg2[%c0, %c0_0, %c0_1] : memref<1x16x128xf32, #tpu.memory_space<vmem>>, vector<1x16x128xf32>
    %1 = vector.shape_cast %0 : vector<1x16x128xf32> to vector<16x128xf32>
    %c0_2 = arith.constant 0 : index
    %c0_3 = arith.constant 0 : index
    %2 = vector.load %arg3[%c0_2, %c0_3] : memref<128x128xf32, #tpu.memory_space<vmem>>, vector<128x128xf32>
    %cst = arith.constant dense<0.000000e+00> : vector<16x128xf32>
    %3 = tpu.matmul %1, %2, %cst {dimension_numbers = #tpu.dot_dimension_numbers<[1], [0], [0], [1], [0, 0, 1, 1], [], []>} : vector<16x128xf32>, vector<128x128xf32>, vector<16x128xf32> -> vector<16x128xf32>
    %c0_4 = arith.constant 0 : index
    %c0_5 = arith.constant 0 : index
    %c0_6 = arith.constant 0 : index
    %4 = vector.load %arg4[%c0_4, %c0_5, %c0_6] : memref<1x1x128xf32, #tpu.memory_space<vmem>>, vector<1x1x128xf32>
    %5 = vector.shape_cast %4 : vector<1x1x128xf32> to vector<1x128xf32>
    %6 = vector.broadcast %5 : vector<1x128xf32> to vector<16x128xf32>
    %7 = arith.addf %3, %6 : vector<16x128xf32>
    %cst_7 = arith.constant 0.000000e+00 : f32
    %8 = vector.broadcast %cst_7 : f32 to vector<16x128xf32>
    %9 = arith.maximumf %7, %8 : vector<16x128xf32>
    %c0_8 = arith.constant 0 : index
    %c0_9 = arith.constant 0 : index
    %c0_10 = arith.constant 0 : index
    %10 = vector.load %arg5[%c0_8, %c0_9, %c0_10] : memref<1x16x128xf32, #tpu.memory_space<vmem>>, vector<1x16x128xf32>
    %11 = vector.shape_cast %10 : vector<1x16x128xf32> to vector<16x128xf32>
    %12 = vector.shape_cast %9 : vector<16x128xf32> to vector<1x16x128xf32>
    tpu.vector_store %arg5[%c0_8, %c0_9, %c0_10], %12 {strides = array<i32>} : memref<1x16x128xf32, #tpu.memory_space<vmem>>, vector<1x16x128xf32>,
    return
  }
  func.func @transform_0(%arg0: i32, %arg1: i32) -> (i32, i32, i32) {
    %c0_i32 = arith.constant 0 : i32
    %c0_i32_0 = arith.constant 0 : i32
    return %arg0, %arg1, %c0_i32 : i32, i32, i32
  }
  func.func @transform_1(%arg0: i32, %arg1: i32) -> (i32, i32) {
    %c0_i32 = arith.constant 0 : i32
    %c0_i32_0 = arith.constant 0 : i32
    %c0_i32_1 = arith.constant 0 : i32
    return %c0_i32, %c0_i32_0 : i32, i32
  }
  func.func @transform_2(%arg0: i32, %arg1: i32) -> (i32, i32, i32) {
    %c0_i32 = arith.constant 0 : i32
    %c0_i32_0 = arith.constant 0 : i32
    %c0_i32_1 = arith.constant 0 : i32
    return %arg0, %c0_i32, %c0_i32_0 : i32, i32, i32
  }
  func.func @transform_3(%arg0: i32, %arg1: i32) -> (i32, i32, i32) {
    %c0_i32 = arith.constant 0 : i32
    %c0_i32_0 = arith.constant 0 : i32
    return %arg0, %arg1, %c0_i32 : i32, i32, i32
  }
}

module attributes {stable_mosaic.version = 11 : i64} {
  func.func @_project_kernel(%arg0: i32, %arg1: i32, %arg2: memref<1x8x128xf32, #tpu.memory_space<vmem>>, %arg3: memref<128x128xf32, #tpu.memory_space<vmem>>, %arg4: memref<1x1x128xf32, #tpu.memory_space<vmem>>, %arg5: memref<1x8x128xf32, #tpu.memory_space<vmem>>) attributes {dimension_semantics = [#tpu.dimension_semantics<parallel>, #tpu.dimension_semantics<parallel>], iteration_bounds = array<i64: 2, 1>, scalar_prefetch = 0 : i64, scratch_operands = 0 : i64, tpu.core_type = #tpu.core_type<tc>, window_params = [{transform_indices = @transform_0, window_bounds = array<i64: 1, 8, 128>}, {pipeline_mode = #tpu.pipeline_mode<synchronous>, transform_indices = @transform_1, window_bounds = array<i64: 128, 128>}, {transform_indices = @transform_2, window_bounds = array<i64: 1, 1, 128>}, {transform_indices = @transform_3, window_bounds = array<i64: 1, 8, 128>}]} {
    %c0 = arith.constant 0 : index
    %c0_0 = arith.constant 0 : index
    %c0_1 = arith.constant 0 : index
    %0 = vector.load %arg2[%c0, %c0_0, %c0_1] : memref<1x8x128xf32, #tpu.memory_space<vmem>>, vector<1x8x128xf32>
    %1 = vector.shape_cast %0 : vector<1x8x128xf32> to vector<8x128xf32>
    %c0_2 = arith.constant 0 : index
    %c0_3 = arith.constant 0 : index
    %2 = vector.load %arg3[%c0_2, %c0_3] : memref<128x128xf32, #tpu.memory_space<vmem>>, vector<128x128xf32>
    %cst = arith.constant dense<0.000000e+00> : vector<8x128xf32>
    %3 = tpu.matmul %1, %2, %cst {dimension_numbers = #tpu.dot_dimension_numbers<[1], [0], [0], [1], [0, 0, 1, 1], [], []>} : vector<8x128xf32>, vector<128x128xf32>, vector<8x128xf32> -> vector<8x128xf32>
    %c0_4 = arith.constant 0 : index
    %c0_5 = arith.constant 0 : index
    %c0_6 = arith.constant 0 : index
    %4 = vector.load %arg4[%c0_4, %c0_5, %c0_6] : memref<1x1x128xf32, #tpu.memory_space<vmem>>, vector<1x1x128xf32>
    %5 = vector.shape_cast %4 : vector<1x1x128xf32> to vector<1x128xf32>
    %6 = vector.broadcast %5 : vector<1x128xf32> to vector<8x128xf32>
    %7 = arith.addf %3, %6 : vector<8x128xf32>
    %cst_7 = arith.constant 0.000000e+00 : f32
    %8 = vector.broadcast %cst_7 : f32 to vector<8x128xf32>
    %9 = arith.maximumf %7, %8 : vector<8x128xf32>
    %c0_8 = arith.constant 0 : index
    %c0_9 = arith.constant 0 : index
    %c0_10 = arith.constant 0 : index
    %10 = vector.load %arg5[%c0_8, %c0_9, %c0_10] : memref<1x8x128xf32, #tpu.memory_space<vmem>>, vector<1x8x128xf32>
    %11 = vector.shape_cast %10 : vector<1x8x128xf32> to vector<8x128xf32>
    %12 = vector.shape_cast %9 : vector<8x128xf32> to vector<1x8x128xf32>
    tpu.vector_store %arg5[%c0_8, %c0_9, %c0_10], %12 {strides = array<i32>} : memref<1x8x128xf32, #tpu.memory_space<vmem>>, vector<1x8x128xf32>,
    return
  }
  func.func @transform_0(%arg0: i32, %arg1: i32) -> (i32, i32, i32) {
    %c0_i32 = arith.constant 0 : i32
    %c0_i32_0 = arith.constant 0 : i32
    return %arg0, %arg1, %c0_i32 : i32, i32, i32
  }
  func.func @transform_1(%arg0: i32, %arg1: i32) -> (i32, i32) {
    %c0_i32 = arith.constant 0 : i32
    %c0_i32_0 = arith.constant 0 : i32
    %c0_i32_1 = arith.constant 0 : i32
    return %c0_i32, %c0_i32_0 : i32, i32
  }
  func.func @transform_2(%arg0: i32, %arg1: i32) -> (i32, i32, i32) {
    %c0_i32 = arith.constant 0 : i32
    %c0_i32_0 = arith.constant 0 : i32
    %c0_i32_1 = arith.constant 0 : i32
    return %arg0, %c0_i32, %c0_i32_0 : i32, i32, i32
  }
  func.func @transform_3(%arg0: i32, %arg1: i32) -> (i32, i32, i32) {
    %c0_i32 = arith.constant 0 : i32
    %c0_i32_0 = arith.constant 0 : i32
    return %arg0, %arg1, %c0_i32 : i32, i32, i32
  }
}

</mosaic_0001>

<llo_original>
// kernel: hier_vgnn_forward.7
$region0: #{hier_vgnn_forward.7}
  #allocation0 [shape = 'u32[]', space=smem, size = 0x4, offset = 0x4, fixed_abs, tag = 'smem constant byte address 0x4 - core index']
  #allocation1 [shape = 'u32[144,128]{1,0:T(1,128)}', space=vmem, size = 0x12000, scoped, tag = 'internal scratch']
  %s0 = inlined_call_operand.vmem [shape: f32[2,16,128], index: 0, kind: input, shape index: {}]
  %s1 = inlined_call_operand.vmem [shape: f32[128,128], index: 1, kind: input, shape index: {}]
  %s2 = inlined_call_operand.vmem [shape: f32[2,1,128], index: 2, kind: input, shape index: {}]
  %s3 = inlined_call_operand.vmem [shape: f32[2,16,128], index: 3, kind: output, shape index: {}]
  %s4 = sld [smem:[#allocation0]]
  $region45: #{hier_vgnn_forward.7} parent=0
    _
  %s6 = ssub.s32 1, %s4
  %s7 = scalar_select 0, %s6, %s4
  loop: start=0, step=1, limit=4
  $region2: #{hier_vgnn_forward.7} parent=0 // loop_pre_header
    _
  $region3: #{hier_vgnn_forward.7} parent=0 // loop_header
    %s9 = sphi 0, %s13
    %p10 = scmp.ge.s32.totalorder %s9, 4
    %s16 = sphi 0, %s28
    %s17 = sphi 0, %s24
    %s18 = sphi 0, %s16
    %s19 = sphi 0, %s17
    %s20 = sphi 0, %s18
    %s21 = sphi 0, %s19
    %s33 = sphi 0, %s35
    %s36 = sphi 0, %s33
    %s37 = sphi 0, %s36
    %s53 = sphi 0, %s37
    %s57 = sphi 0, %s57
    %s59 = sphi 0, %s57
    %s60 = sphi 0, %s59
    %s74 = sphi 0, %s60
    %s80 = sphi 0, %s82
    %s83 = sphi 0, %s80
    %s84 = sphi 0, %s83
    %s100 = sphi 0, %s84
    %s108 = sphi 0, %s110
    %s111 = sphi 0, %s108
    %s112 = sphi 0, %s111
    %s128 = sphi 0, %s112
  $region4: #{hier_vgnn_forward.7} parent=0 // loop_header_branch
    %12 = sbr.rel (%p10) target = $region8
  $region5: #{hier_vgnn_forward.7} parent=0 // loop_body
    %s14 = ssub.s32 %s9, 1
    %s15 = ssub.s32 %s9, 2
    %s22 = sadd.s32 1, %s17
    %p23 = scmp.ge.s32.totalorder %s22, 1
    %s24 = scalar_select %p23, 0, %s22
    %s25 = sadd.s32 1, %s16
    %s26 = scalar_select %p23, %s25, %s16
    %p27 = scmp.ge.s32.totalorder %s26, 2
    %s28 = scalar_select %p27, 0, %s26
    %s29 = ssub.s32 %s16, %s28
    %s30 = ssub.s32 %s17, %s24
    %s31 = sor.u32 %s29, %s30
    %p32 = scmp.eq.s32.totalorder %s31, 0
    %s34 = sadd.s32 %s33, 1
    %s35 = scalar_select %p32, %s33, %s34
    %p38 = pneg %p32
    %p39 = scmp.eq.s32.totalorder %s9, 1
    %p40 = por %p38, %p39
    %p41 = scmp.ne.s32.totalorder %s33, %s36
    %p42 = scmp.eq.s32.totalorder %s9, 0
    %p43 = por %p41, %p42
    %p44 = scmp.ne.s32.totalorder %s33, %s36
    %p45 = scmp.eq.s32.totalorder %s14, 1
    %p46 = por %p44, %p45
    %p47 = scmp.ne.s32.totalorder %s36, %s37
    %p48 = scmp.eq.s32.totalorder %s14, 0
    %p49 = por %p47, %p48
    %p50 = scmp.ne.s32.totalorder %s36, %s37
    %p51 = scmp.eq.s32.totalorder %s15, 1
    %p52 = por %p50, %p51
    %p54 = scmp.ne.s32.totalorder %s37, %s53
    %p55 = scmp.eq.s32.totalorder %s15, 0
    %p56 = por %p54, %p55
    %s58 = sadd.s32 %s57, 1
    %p61 = scmp.eq.s32.totalorder %s9, 1
    %p62 = scmp.ne.s32.totalorder %s57, %s59
    %p63 = scmp.eq.s32.totalorder %s9, 0
    %p64 = por %p62, %p63
    %p65 = scmp.ne.s32.totalorder %s57, %s59
    %p66 = scmp.eq.s32.totalorder %s14, 1
    %p67 = por %p65, %p66
    %p68 = scmp.ne.s32.totalorder %s59, %s60
    %p69 = scmp.eq.s32.totalorder %s14, 0
    %p70 = por %p68, %p69
    %p71 = scmp.ne.s32.totalorder %s59, %s60
    %p72 = scmp.eq.s32.totalorder %s15, 1
    %p73 = por %p71, %p72
    %p75 = scmp.ne.s32.totalorder %s60, %s74
    %p76 = scmp.eq.s32.totalorder %s15, 0
    %p77 = por %p75, %p76
    %s78 = ssub.s32 %s16, %s28
    %p79 = scmp.eq.s32.totalorder %s78, 0
    %s81 = sadd.s32 %s80, 1
    %s82 = scalar_select %p79, %s80, %s81
    %p85 = pneg %p79
    %p86 = scmp.eq.s32.totalorder %s9, 1
    %p87 = por %p85, %p86
    %p88 = scmp.ne.s32.totalorder %s80, %s83
    %p89 = scmp.eq.s32.totalorder %s9, 0
    %p90 = por %p88, %p89
    %p91 = scmp.ne.s32.totalorder %s80, %s83
    %p92 = scmp.eq.s32.totalorder %s14, 1
    %p93 = por %p91, %p92
    %p94 = scmp.ne.s32.totalorder %s83, %s84
    %p95 = scmp.eq.s32.totalorder %s14, 0
    %p96 = por %p94, %p95
    %p97 = scmp.ne.s32.totalorder %s83, %s84
    %p98 = scmp.eq.s32.totalorder %s15, 1
    %p99 = por %p97, %p98
    %p101 = scmp.ne.s32.totalorder %s84, %s100
    %p102 = scmp.eq.s32.totalorder %s15, 0
    %p103 = por %p101, %p102
    %s104 = ssub.s32 %s16, %s28
    %s105 = ssub.s32 %s17, %s24
    %s106 = sor.u32 %s104, %s105
    %p107 = scmp.eq.s32.totalorder %s106, 0
    %s109 = sadd.s32 %s108, 1
    %s110 = scalar_select %p107, %s108, %s109
    %p113 = pneg %p107
    %p114 = scmp.eq.s32.totalorder %s9, 1
    %p115 = por %p113, %p114
    %p116 = scmp.ne.s32.totalorder %s108, %s111
    %p117 = scmp.eq.s32.totalorder %s9, 0
    %p118 = por %p116, %p117
    %p119 = scmp.ne.s32.totalorder %s108, %s111
    %p120 = scmp.eq.s32.totalorder %s14, 1
    %p121 = por %p119, %p120
    %p122 = scmp.ne.s32.totalorder %s111, %s112
    %p123 = scmp.eq.s32.totalorder %s14, 0
    %p124 = por %p122, %p123
    %p125 = scmp.ne.s32.totalorder %s111, %s112
    %p126 = scmp.eq.s32.totalorder %s15, 1
    %p127 = por %p125, %p126
    %p129 = scmp.ne.s32.totalorder %s112, %s128
    %p130 = scmp.eq.s32.totalorder %s15, 0
    %p131 = por %p129, %p130
    %p132 = scmp.le.s32.totalorder 1, %s9
    %p133 = scmp.lt.s32.totalorder %s9, 3
    %p134 = pnand %p132, %p133
    %p135 = pneg %p134
    // Predicated region
    $region9: #{hier_vgnn_forward.7} parent=5 // pred_check
      _
    $region10: #{hier_vgnn_forward.7} parent=5 // pred_check_branch
      %137 = sbr.rel (%p134) target = $region12
    $region11: #{hier_vgnn_forward.7} parent=5 // pred_region
      %s138 = ssub.s32 %s9, 1
      // Predicated region
      $region13: #{hier_vgnn_forward.7} parent=11 // pred_check
        %p139 = pneg %p70
      $region14: #{hier_vgnn_forward.7} parent=11 // pred_check_branch
        %141 = sbr.rel (%p139) target = $region16
      $region15: #{hier_vgnn_forward.7} parent=11 // pred_region
        _
      $region16: #{hier_vgnn_forward.7} parent=11 // pred_fallthru
        _
    $region12: #{hier_vgnn_forward.7} parent=5 // pred_fallthru
      _
    %p142 = scmp.lt.s32.totalorder %s9, 2
    // Predicated region
    $region17: #{hier_vgnn_forward.7} parent=5 // pred_check
      %p143 = pneg %p142
    $region18: #{hier_vgnn_forward.7} parent=5 // pred_check_branch
      %145 = sbr.rel (%p143) target = $region20
    $region19: #{hier_vgnn_forward.7} parent=5 // pred_region
      // Predicated region
      $region21: #{hier_vgnn_forward.7} parent=19 // pred_check
        %p146 = pneg %p43
      $region22: #{hier_vgnn_forward.7} parent=19 // pred_check_branch
        %148 = sbr.rel (%p146) target = $region24
      $region23: #{hier_vgnn_forward.7} parent=19 // pred_region
        %s149 = smul.u32 2, %s17
        %p150 = scmp.lt.s32.totalorder %s16, 1
        %s151 = scalar_select %p150, %s16, 1
        %p152 = scmp.lt.s32.totalorder %s149, 1
        %s153 = scalar_select %p152, %s149, 1
        %s154 = smul.addr %s151, 2
        %s155 = sadd.s32 %s153, %s154
        %s156 = smul.addr %s155, 8
        %s157 = scalar_lea.vmem %s0, %s156
        %s158 = smul.u32 2, %s17
      $region24: #{hier_vgnn_forward.7} parent=19 // pred_fallthru
        _
      // Predicated region
      $region25: #{hier_vgnn_forward.7} parent=19 // pred_check
        %p159 = pneg %p90
      $region26: #{hier_vgnn_forward.7} parent=19 // pred_check_branch
        %161 = sbr.rel (%p159) target = $region28
      $region27: #{hier_vgnn_forward.7} parent=19 // pred_region
        %p162 = scmp.lt.s32.totalorder %s16, 1
        %s163 = scalar_select %p162, %s16, 1
        %s164 = scalar_lea.vmem %s2, %s163
      $region28: #{hier_vgnn_forward.7} parent=19 // pred_fallthru
        _
    $region20: #{hier_vgnn_forward.7} parent=5 // pred_fallthru
      _
    %p165 = scmp.le.s32.totalorder 1, %s9
    %p166 = scmp.lt.s32.totalorder %s9, 3
    %p167 = pnand %p165, %p166
    %p168 = pneg %p167
    // Predicated region
    $region29: #{hier_vgnn_forward.7} parent=5 // pred_check
      _
    $region30: #{hier_vgnn_forward.7} parent=5 // pred_check_branch
      %170 = sbr.rel (%p167) target = $region32
    $region31: #{hier_vgnn_forward.7} parent=5 // pred_region
      %s171 = ssub.s32 %s9, 1
      %s172 = smul.u32 2, %s19
      %p173 = scmp.lt.s32.totalorder %s18, 1
      %s174 = scalar_select %p173, %s18, 1
      %p175 = scmp.lt.s32.totalorder %s172, 1
      %s176 = scalar_select %p175, %s172, 1
      %s177 = smul.addr %s174, 2
      %s178 = sadd.s32 %s176, %s177
      %s179 = smul.addr %s178, 8
      %s180 = scalar_lea.vmem %s0, %s179
      %p181 = pneg %p49
      %p182 = pneg %p46
      %p183 = pneg %p70
      %p184 = pneg %p67
      %p185 = scmp.lt.s32.totalorder %s18, 1
      %s186 = scalar_select %p185, %s18, 1
      %s187 = scalar_lea.vmem %s2, %s186
      %p188 = pneg %p96
      %p189 = pneg %p93
      %p190 = pneg %p124
      %p191 = pneg %p121
      %s192 = smul.u32 2, %s19
      %p193 = scmp.lt.s32.totalorder %s18, 1
      %s194 = scalar_select %p193, %s18, 1
      %p195 = scmp.lt.s32.totalorder %s192, 1
      %s196 = scalar_select %p195, %s192, 1
      %s197 = smul.addr %s194, 2
      %s198 = sadd.s32 %s196, %s197
      %s199 = smul.addr %s198, 8
      %s200 = scalar_lea.vmem %s3, %s199
      %s201 = smul.u32 2, %s19
      %p202 = scmp.lt.s32.totalorder %s18, 1
      %s203 = scalar_select %p202, %s18, 1
      %p204 = scmp.lt.s32.totalorder %s201, 1
      %s205 = scalar_select %p204, %s201, 1
      %s206 = smul.addr %s203, 2
      %s207 = sadd.s32 %s205, %s206
      %s208 = smul.addr %s207, 8
      %s209 = scalar_lea.vmem %s0, %s208
      %s210 = smul.u32 2, %s19
      %p211 = scmp.lt.s32.totalorder %s18, 1
      %s212 = scalar_select %p211, %s18, 1
      %s213 = scalar_lea.vmem %s2, %s212
      %s214 = smul.u32 2, %s19
      %p215 = scmp.lt.s32.totalorder %s18, 1
      %s216 = scalar_select %p215, %s18, 1
      %p217 = scmp.lt.s32.totalorder %s214, 1
      %s218 = scalar_select %p217, %s214, 1
      %s219 = smul.addr %s216, 2
      %s220 = sadd.s32 %s218, %s219
      %s221 = smul.addr %s220, 8
      %s222 = scalar_lea.vmem %s3, %s221
      %s223 = smul.u32 2, %s19
      %v224 = vld [vmem:[%s209] sm:$0xff]
      %v225 = vld [vmem:[%s209 + $0x8] sm:$0xff]
      %v226 = vld [vmem:[%s1] sm:$0xff]
      %v227 = vld [vmem:[%s1 + $0x8] sm:$0xff]
      %v228 = vld [vmem:[%s1 + $0x10] sm:$0xff]
      %v229 = vld [vmem:[%s1 + $0x18] sm:$0xff]
      %v230 = vld [vmem:[%s1 + $0x20] sm:$0xff]
      %v231 = vld [vmem:[%s1 + $0x28] sm:$0xff]
      %v232 = vld [vmem:[%s1 + $0x30] sm:$0xff]
      %v233 = vld [vmem:[%s1 + $0x38] sm:$0xff]
      %v234 = vld [vmem:[%s1 + $0x40] sm:$0xff]
      %v235 = vld [vmem:[%s1 + $0x48] sm:$0xff]
      %v236 = vld [vmem:[%s1 + $0x50] sm:$0xff]
      %v237 = vld [vmem:[%s1 + $0x58] sm:$0xff]
      %v238 = vld [vmem:[%s1 + $0x60] sm:$0xff]
      %v239 = vld [vmem:[%s1 + $0x68] sm:$0xff]
      %v240 = vld [vmem:[%s1 + $0x70] sm:$0xff]
      %v241 = vld [vmem:[%s1 + $0x78] sm:$0xff]
      %v242 = vld [vmem:[%s213] sm:$0x1]
      %v244 = vlaneseq
      %v245 = vshrl.u32 %v244, 7
      %v246 = vsub.s32 0, %v245
      %v247 = vrot.slane %v242, %v246
      %249 = vmatprep.subr.mxu0 0.0
      %250 = vmatpush1.msra.mxu0 %v241
      %251 = vmatprep.subr.mxu0 0.0
      %252 = vmatpush1.msra.mxu0 %v240
      %253 = vmatprep.subr.mxu0 0.0
      %254 = vmatpush1.msra.mxu0 %v239
      %255 = vmatprep.subr.mxu0 0.0
      %256 = vmatpush1.msra.mxu0 %v238
      %257 = vmatprep.subr.mxu0 0.0
      %258 = vmatpush1.msra.mxu0 %v237
      %259 = vmatprep.subr.mxu0 0.0
      %260 = vmatpush1.msra.mxu0 %v236
      %261 = vmatprep.subr.mxu0 0.0
      %262 = vmatpush1.msra.mxu0 %v235
      %263 = vmatprep.subr.mxu0 0.0
      %264 = vmatpush1.msra.mxu0 %v234
      %265 = vmatprep.subr.mxu0 0.0
      %266 = vmatpush1.msra.mxu0 %v233
      %267 = vmatprep.subr.mxu0 0.0
      %268 = vmatpush1.msra.mxu0 %v232
      %269 = vmatprep.subr.mxu0 0.0
      %270 = vmatpush1.msra.mxu0 %v231
      %271 = vmatprep.subr.mxu0 0.0
      %272 = vmatpush1.msra.mxu0 %v230
      %273 = vmatprep.subr.mxu0 0.0
      %274 = vmatpush1.msra.mxu0 %v229
      %275 = vmatprep.subr.mxu0 0.0
      %276 = vmatpush1.msra.mxu0 %v228
      %277 = vmatprep.subr.mxu0 0.0
      %278 = vmatpush1.msra.mxu0 %v227
      %279 = vmatprep.subr.mxu0 0.0
      %280 = vmatpush1.msra.mxu0 %v226
      %281 = vmatprep.subr.mxu0 0.0
      %282 = vmatpush2.msra.mxu0 0.0
      %283 = vmatprep.subr.mxu0 0.0
      %284 = vmatpush2.msra.mxu0 0.0
      %285 = vmatprep.subr.mxu0 0.0
      %286 = vmatpush2.msra.mxu0 0.0
      %287 = vmatprep.subr.mxu0 0.0
      %288 = vmatpush2.msra.mxu0 0.0
      %289 = vmatprep.subr.mxu0 0.0
      %290 = vmatpush2.msra.mxu0 0.0
      %291 = vmatprep.subr.mxu0 0.0
      %292 = vmatpush2.msra.mxu0 0.0
      %293 = vmatprep.subr.mxu0 0.0
      %294 = vmatpush2.msra.mxu0 0.0
      %295 = vmatprep.subr.mxu0 0.0
      %296 = vmatpush2.msra.mxu0 0.0
      %297 = vmatprep.subr.mxu0 0.0
      %298 = vmatpush2.msra.mxu0 0.0
      %299 = vmatprep.subr.mxu0 0.0
      %300 = vmatpush2.msra.mxu0 0.0
      %301 = vmatprep.subr.mxu0 0.0
      %302 = vmatpush2.msra.mxu0 0.0
      %303 = vmatprep.subr.mxu0 0.0
      %304 = vmatpush2.msra.mxu0 0.0
      %305 = vmatprep.subr.mxu0 0.0
      %306 = vmatpush2.msra.mxu0 0.0
      %307 = vmatprep.subr.mxu0 0.0
      %308 = vmatpush2.msra.mxu0 0.0
      %309 = vmatprep.subr.mxu0 0.0
      %310 = vmatpush2.msra.mxu0 0.0
      %311 = vmatprep.subr.mxu0 0.0
      %312 = vmatpush2.msra.mxu0 0.0
      %313 = vmatprep.mubr.f32.mxu0 0.0
      %314 = vmatmul.mubr.f32.gmra.mxu0 %v224
      %v315 = vpop.f32.mrf.mxu0
      %v316 = vadd.f32 %v247, %v315
      %v317 = vpop.f32.mrf.mxu0
      %318 = vmatprep.mubr.f32.mxu0 0.0
      %319 = vmatmul.mubr.f32.gmra.mxu0 %v225
      %v320 = vpop.f32.mrf.mxu0
      %v321 = vadd.f32 %v247, %v320
      %v322 = vpop.f32.mrf.mxu0
      %323 = vdwg.mxu0
      %v324 = vmax.f32 %v316, 0.0
      %v325 = vmax.f32 %v321, 0.0
      %326 = vst [vmem:[%s222] sm:$0xff] %v324
      %327 = vst [vmem:[%s222 + $0x8] sm:$0xff] %v325
      %s328 = smul.u32 2, %s19
      %p329 = scmp.lt.s32.totalorder %s18, 1
      %s330 = scalar_select %p329, %s18, 1
      %p331 = scmp.lt.s32.totalorder %s328, 1
      %s332 = scalar_select %p331, %s328, 1
      %s333 = smul.addr %s330, 2
      %s334 = sadd.s32 %s332, %s333
      %s335 = smul.addr %s334, 8
      %s336 = scalar_lea.vmem %s3, %s335
      // Predicated region
      $region33: #{hier_vgnn_forward.7} parent=31 // pred_check
        %p337 = pneg %p121
      $region34: #{hier_vgnn_forward.7} parent=31 // pred_check_branch
        %339 = sbr.rel (%p337) target = $region36
      $region35: #{hier_vgnn_forward.7} parent=31 // pred_region
        %s340 = smul.u32 2, %s19
      $region36: #{hier_vgnn_forward.7} parent=31 // pred_fallthru
        _
    $region32: #{hier_vgnn_forward.7} parent=5 // pred_fallthru
      _
    %p341 = scmp.le.s32.totalorder 2, %s9
    // Predicated region
    $region37: #{hier_vgnn_forward.7} parent=5 // pred_check
      %p342 = pneg %p341
    $region38: #{hier_vgnn_forward.7} parent=5 // pred_check_branch
      %344 = sbr.rel (%p342) target = $region40
    $region39: #{hier_vgnn_forward.7} parent=5 // pred_region
      %s345 = ssub.s32 %s9, 2
      // Predicated region
      $region41: #{hier_vgnn_forward.7} parent=39 // pred_check
        %p346 = pneg %p127
      $region42: #{hier_vgnn_forward.7} parent=39 // pred_check_branch
        %348 = sbr.rel (%p346) target = $region44
      $region43: #{hier_vgnn_forward.7} parent=39 // pred_region
        %s349 = smul.u32 2, %s21
        %p350 = scmp.lt.s32.totalorder %s20, 1
        %s351 = scalar_select %p350, %s20, 1
        %p352 = scmp.lt.s32.totalorder %s349, 1
        %s353 = scalar_select %p352, %s349, 1
        %s354 = smul.addr %s351, 2
        %s355 = sadd.s32 %s353, %s354
        %s356 = smul.addr %s355, 8
        %s357 = scalar_lea.vmem %s3, %s356
      $region44: #{hier_vgnn_forward.7} parent=39 // pred_fallthru
        _
    $region40: #{hier_vgnn_forward.7} parent=5 // pred_fallthru
      _
  $region6: #{hier_vgnn_forward.7} parent=0 // loop_footer
    %s13 = sadd.s32 1, %s9
  $region7: #{hier_vgnn_forward.7} parent=0 // loop_footer_branch
    %8 = sbr.rel target = $region3
  $region8: #{hier_vgnn_forward.7} parent=0 // loop_exit
    _

// kernel: hier_vgnn_forward.5
$region0: #{hier_vgnn_forward.5}
  #allocation0 [shape = 'u32[]', space=smem, size = 0x4, offset = 0x4, fixed_abs, tag = 'smem constant byte address 0x4 - core index']
  #allocation1 [shape = 'u32[144,128]{1,0:T(1,128)}', space=vmem, size = 0x12000, scoped, tag = 'internal scratch']
  %s0 = inlined_call_operand.vmem [shape: f32[2,8,128], index: 0, kind: input, shape index: {}]
  %s1 = inlined_call_operand.vmem [shape: f32[128,128], index: 1, kind: input, shape index: {}]
  %s2 = inlined_call_operand.vmem [shape: f32[2,1,128], index: 2, kind: input, shape index: {}]
  %s3 = inlined_call_operand.hbm [shape: f32[2,8,128], index: 3, kind: output, shape index: {}]
  %s4 = sld [smem:[#allocation0]]
  $region45: #{hier_vgnn_forward.5} parent=0
    _
  %s6 = ssub.s32 1, %s4
  %s7 = scalar_select 0, %s6, %s4
  $region1: #{hier_vgnn_forward.5} parent=0
    #allocation2 [shape = 'u8[8192]{0}', space=vmem, size = 0x2000, scoped, tag = 'output window, operand 0']
    #allocation3 [shape = 's32[2]{0}', space=sflag, size = 0x8, scoped, tag = 'scoped memory for hier_vgnn_forward.5']
    %8 = vsyncpa [#allocation3], 0
    %s9 = scalar_lea.sflag [#allocation3], 1
    %10 = vsyncpa %s9, 0
    loop: start=0, step=1, limit=4
    $region2: #{hier_vgnn_forward.5} parent=1 // loop_pre_header
      _
    $region3: #{hier_vgnn_forward.5} parent=1 // loop_header
      %s12 = sphi 0, %s16
      %p13 = scmp.ge.s32.totalorder %s12, 4
      %s19 = sphi 0, %s31
      %s20 = sphi 0, %s27
      %s21 = sphi 0, %s19
      %s22 = sphi 0, %s20
      %s23 = sphi 0, %s21
      %s24 = sphi 0, %s22
      %s36 = sphi 0, %s38
      %s39 = sphi 0, %s36
      %s40 = sphi 0, %s39
      %s56 = sphi 0, %s40
      %s60 = sphi 0, %s60
      %s62 = sphi 0, %s60
      %s63 = sphi 0, %s62
      %s77 = sphi 0, %s63
      %s83 = sphi 0, %s85
      %s86 = sphi 0, %s83
      %s87 = sphi 0, %s86
      %s103 = sphi 0, %s87
      %s111 = sphi 0, %s113
      %s114 = sphi 0, %s111
      %s115 = sphi 0, %s114
      %s131 = sphi 0, %s115
    $region4: #{hier_vgnn_forward.5} parent=1 // loop_header_branch
      %15 = sbr.rel (%p13) target = $region8
    $region5: #{hier_vgnn_forward.5} parent=1 // loop_body
      %s17 = ssub.s32 %s12, 1
      %s18 = ssub.s32 %s12, 2
      %s25 = sadd.s32 1, %s20
      %p26 = scmp.ge.s32.totalorder %s25, 1
      %s27 = scalar_select %p26, 0, %s25
      %s28 = sadd.s32 1, %s19
      %s29 = scalar_select %p26, %s28, %s19
      %p30 = scmp.ge.s32.totalorder %s29, 2
      %s31 = scalar_select %p30, 0, %s29
      %s32 = ssub.s32 %s19, %s31
      %s33 = ssub.s32 %s20, %s27
      %s34 = sor.u32 %s32, %s33
      %p35 = scmp.eq.s32.totalorder %s34, 0
      %s37 = sadd.s32 %s36, 1
      %s38 = scalar_select %p35, %s36, %s37
      %p41 = pneg %p35
      %p42 = scmp.eq.s32.totalorder %s12, 1
      %p43 = por %p41, %p42
      %p44 = scmp.ne.s32.totalorder %s36, %s39
      %p45 = scmp.eq.s32.totalorder %s12, 0
      %p46 = por %p44, %p45
      %p47 = scmp.ne.s32.totalorder %s36, %s39
      %p48 = scmp.eq.s32.totalorder %s17, 1
      %p49 = por %p47, %p48
      %p50 = scmp.ne.s32.totalorder %s39, %s40
      %p51 = scmp.eq.s32.totalorder %s17, 0
      %p52 = por %p50, %p51
      %p53 = scmp.ne.s32.totalorder %s39, %s40
      %p54 = scmp.eq.s32.totalorder %s18, 1
      %p55 = por %p53, %p54
      %p57 = scmp.ne.s32.totalorder %s40, %s56
      %p58 = scmp.eq.s32.totalorder %s18, 0
      %p59 = por %p57, %p58
      %s61 = sadd.s32 %s60, 1
      %p64 = scmp.eq.s32.totalorder %s12, 1
      %p65 = scmp.ne.s32.totalorder %s60, %s62
      %p66 = scmp.eq.s32.totalorder %s12, 0
      %p67 = por %p65, %p66
      %p68 = scmp.ne.s32.totalorder %s60, %s62
      %p69 = scmp.eq.s32.totalorder %s17, 1
      %p70 = por %p68, %p69
      %p71 = scmp.ne.s32.totalorder %s62, %s63
      %p72 = scmp.eq.s32.totalorder %s17, 0
      %p73 = por %p71, %p72
      %p74 = scmp.ne.s32.totalorder %s62, %s63
      %p75 = scmp.eq.s32.totalorder %s18, 1
      %p76 = por %p74, %p75
      %p78 = scmp.ne.s32.totalorder %s63, %s77
      %p79 = scmp.eq.s32.totalorder %s18, 0
      %p80 = por %p78, %p79
      %s81 = ssub.s32 %s19, %s31
      %p82 = scmp.eq.s32.totalorder %s81, 0
      %s84 = sadd.s32 %s83, 1
      %s85 = scalar_select %p82, %s83, %s84
      %p88 = pneg %p82
      %p89 = scmp.eq.s32.totalorder %s12, 1
      %p90 = por %p88, %p89
      %p91 = scmp.ne.s32.totalorder %s83, %s86
      %p92 = scmp.eq.s32.totalorder %s12, 0
      %p93 = por %p91, %p92
      %p94 = scmp.ne.s32.totalorder %s83, %s86
      %p95 = scmp.eq.s32.totalorder %s17, 1
      %p96 = por %p94, %p95
      %p97 = scmp.ne.s32.totalorder %s86, %s87
      %p98 = scmp.eq.s32.totalorder %s17, 0
      %p99 = por %p97, %p98
      %p100 = scmp.ne.s32.totalorder %s86, %s87
      %p101 = scmp.eq.s32.totalorder %s18, 1
      %p102 = por %p100, %p101
      %p104 = scmp.ne.s32.totalorder %s87, %s103
      %p105 = scmp.eq.s32.totalorder %s18, 0
      %p106 = por %p104, %p105
      %s107 = ssub.s32 %s19, %s31
      %s108 = ssub.s32 %s20, %s27
      %s109 = sor.u32 %s107, %s108
      %p110 = scmp.eq.s32.totalorder %s109, 0
      %s112 = sadd.s32 %s111, 1
      %s113 = scalar_select %p110, %s111, %s112
      %p116 = pneg %p110
      %p117 = scmp.eq.s32.totalorder %s12, 1
      %p118 = por %p116, %p117
      %p119 = scmp.ne.s32.totalorder %s111, %s114
      %p120 = scmp.eq.s32.totalorder %s12, 0
      %p121 = por %p119, %p120
      %p122 = scmp.ne.s32.totalorder %s111, %s114
      %p123 = scmp.eq.s32.totalorder %s17, 1
      %p124 = por %p122, %p123
      %p125 = scmp.ne.s32.totalorder %s114, %s115
      %p126 = scmp.eq.s32.totalorder %s17, 0
      %p127 = por %p125, %p126
      %p128 = scmp.ne.s32.totalorder %s114, %s115
      %p129 = scmp.eq.s32.totalorder %s18, 1
      %p130 = por %p128, %p129
      %p132 = scmp.ne.s32.totalorder %s115, %s131
      %p133 = scmp.eq.s32.totalorder %s18, 0
      %p134 = por %p132, %p133
      %p135 = scmp.le.s32.totalorder 1, %s12
      %p136 = scmp.lt.s32.totalorder %s12, 3
      %p137 = pnand %p135, %p136
      %p138 = pneg %p137
      // Predicated region
      $region9: #{hier_vgnn_forward.5} parent=5 // pred_check
        _
      $region10: #{hier_vgnn_forward.5} parent=5 // pred_check_branch
        %140 = sbr.rel (%p137) target = $region12
      $region11: #{hier_vgnn_forward.5} parent=5 // pred_region
        %s141 = ssub.s32 %s12, 1
        // Predicated region
        $region13: #{hier_vgnn_forward.5} parent=11 // pred_check
          %p142 = pneg %p73
        $region14: #{hier_vgnn_forward.5} parent=11 // pred_check_branch
          %144 = sbr.rel (%p142) target = $region16
        $region15: #{hier_vgnn_forward.5} parent=11 // pred_region
          _
        $region16: #{hier_vgnn_forward.5} parent=11 // pred_fallthru
          _
      $region12: #{hier_vgnn_forward.5} parent=5 // pred_fallthru
        _
      %p145 = scmp.lt.s32.totalorder %s12, 2
      // Predicated region
      $region17: #{hier_vgnn_forward.5} parent=5 // pred_check
        %p146 = pneg %p145
      $region18: #{hier_vgnn_forward.5} parent=5 // pred_check_branch
        %148 = sbr.rel (%p146) target = $region20
      $region19: #{hier_vgnn_forward.5} parent=5 // pred_region
        // Predicated region
        $region21: #{hier_vgnn_forward.5} parent=19 // pred_check
          %p149 = pneg %p46
        $region22: #{hier_vgnn_forward.5} parent=19 // pred_check_branch
          %151 = sbr.rel (%p149) target = $region24
        $region23: #{hier_vgnn_forward.5} parent=19 // pred_region
          %p152 = scmp.lt.s32.totalorder %s19, 1
          %s153 = scalar_select %p152, %s19, 1
          %p154 = scmp.lt.s32.totalorder %s20, 0
          %s155 = scalar_select %p154, %s20, 0
          %s156 = sadd.s32 %s155, %s153
          %s157 = smul.addr %s156, 8
          %s158 = scalar_lea.vmem %s0, %s157
        $region24: #{hier_vgnn_forward.5} parent=19 // pred_fallthru
          _
        // Predicated region
        $region25: #{hier_vgnn_forward.5} parent=19 // pred_check
          %p159 = pneg %p93
        $region26: #{hier_vgnn_forward.5} parent=19 // pred_check_branch
          %161 = sbr.rel (%p159) target = $region28
        $region27: #{hier_vgnn_forward.5} parent=19 // pred_region
          %p162 = scmp.lt.s32.totalorder %s19, 1
          %s163 = scalar_select %p162, %s19, 1
          %s164 = scalar_lea.vmem %s2, %s163
        $region28: #{hier_vgnn_forward.5} parent=19 // pred_fallthru
          _
      $region20: #{hier_vgnn_forward.5} parent=5 // pred_fallthru
        _
      %p165 = scmp.le.s32.totalorder 1, %s12
      %p166 = scmp.lt.s32.totalorder %s12, 3
      %p167 = pnand %p165, %p166
      %p168 = pneg %p167
      // Predicated region
      $region29: #{hier_vgnn_forward.5} parent=5 // pred_check
        _
      $region30: #{hier_vgnn_forward.5} parent=5 // pred_check_branch
        %170 = sbr.rel (%p167) target = $region32
      $region31: #{hier_vgnn_forward.5} parent=5 // pred_region
        %s171 = ssub.s32 %s12, 1
        %p172 = scmp.lt.s32.totalorder %s21, 1
        %s173 = scalar_select %p172, %s21, 1
        %p174 = scmp.lt.s32.totalorder %s22, 0
        %s175 = scalar_select %p174, %s22, 0
        %s176 = sadd.s32 %s175, %s173
        %s177 = smul.addr %s176, 8
        %s178 = scalar_lea.vmem %s0, %s177
        %p179 = pneg %p52
        %p180 = pneg %p49
        %p181 = pneg %p73
        %p182 = pneg %p70
        %p183 = scmp.lt.s32.totalorder %s21, 1
        %s184 = scalar_select %p183, %s21, 1
        %s185 = scalar_lea.vmem %s2, %s184
        %p186 = pneg %p99
        %p187 = pneg %p96
        %p188 = pneg %p127
        %p189 = pneg %p124
        %s190 = sand.u32 %s114, 1
        %s191 = scalar_lea.sflag [#allocation3], %s190
        %s192 = sand.u32 %s114, 1
        %s193 = smul.addr %s192, 8
        %s194 = scalar_lea.vmem [#allocation2], %s193
        %p195 = scmp.lt.s32.totalorder %s21, 1
        %s196 = scalar_select %p195, %s21, 1
        %p197 = scmp.lt.s32.totalorder %s22, 0
        %s198 = scalar_select %p197, %s22, 0
        %s199 = sadd.s32 %s198, %s196
        %s200 = smul.addr %s199, 8
        %s201 = scalar_lea.vmem %s0, %s200
        %p202 = scmp.lt.s32.totalorder %s21, 1
        %s203 = scalar_select %p202, %s21, 1
        %s204 = scalar_lea.vmem %s2, %s203
        %v205 = vld [vmem:[%s201] sm:$0xff]
        %v206 = vld [vmem:[%s1] sm:$0xff]
        %v207 = vld [vmem:[%s1 + $0x8] sm:$0xff]
        %v208 = vld [vmem:[%s1 + $0x10] sm:$0xff]
        %v209 = vld [vmem:[%s1 + $0x18] sm:$0xff]
        %v210 = vld [vmem:[%s1 + $0x20] sm:$0xff]
        %v211 = vld [vmem:[%s1 + $0x28] sm:$0xff]
        %v212 = vld [vmem:[%s1 + $0x30] sm:$0xff]
        %v213 = vld [vmem:[%s1 + $0x38] sm:$0xff]
        %v214 = vld [vmem:[%s1 + $0x40] sm:$0xff]
        %v215 = vld [vmem:[%s1 + $0x48] sm:$0xff]
        %v216 = vld [vmem:[%s1 + $0x50] sm:$0xff]
        %v217 = vld [vmem:[%s1 + $0x58] sm:$0xff]
        %v218 = vld [vmem:[%s1 + $0x60] sm:$0xff]
        %v219 = vld [vmem:[%s1 + $0x68] sm:$0xff]
        %v220 = vld [vmem:[%s1 + $0x70] sm:$0xff]
        %v221 = vld [vmem:[%s1 + $0x78] sm:$0xff]
        %v222 = vld [vmem:[%s204] sm:$0x1]
        %v224 = vlaneseq
        %v225 = vshrl.u32 %v224, 7
        %v226 = vsub.s32 0, %v225
        %v227 = vrot.slane %v222, %v226
        %229 = vmatprep.subr.mxu0 0.0
        %230 = vmatpush1.msra.mxu0 %v221
        %231 = vmatprep.subr.mxu0 0.0
        %232 = vmatpush1.msra.mxu0 %v220
        %233 = vmatprep.subr.mxu0 0.0
        %234 = vmatpush1.msra.mxu0 %v219
        %235 = vmatprep.subr.mxu0 0.0
        %236 = vmatpush1.msra.mxu0 %v218
        %237 = vmatprep.subr.mxu0 0.0
        %238 = vmatpush1.msra.mxu0 %v217
        %239 = vmatprep.subr.mxu0 0.0
        %240 = vmatpush1.msra.mxu0 %v216
        %241 = vmatprep.subr.mxu0 0.0
        %242 = vmatpush1.msra.mxu0 %v215
        %243 = vmatprep.subr.mxu0 0.0
        %244 = vmatpush1.msra.mxu0 %v214
        %245 = vmatprep.subr.mxu0 0.0
        %246 = vmatpush1.msra.mxu0 %v213
        %247 = vmatprep.subr.mxu0 0.0
        %248 = vmatpush1.msra.mxu0 %v212
        %249 = vmatprep.subr.mxu0 0.0
        %250 = vmatpush1.msra.mxu0 %v211
        %251 = vmatprep.subr.mxu0 0.0
        %252 = vmatpush1.msra.mxu0 %v210
        %253 = vmatprep.subr.mxu0 0.0
        %254 = vmatpush1.msra.mxu0 %v209
        %255 = vmatprep.subr.mxu0 0.0
        %256 = vmatpush1.msra.mxu0 %v208
        %257 = vmatprep.subr.mxu0 0.0
        %258 = vmatpush1.msra.mxu0 %v207
        %259 = vmatprep.subr.mxu0 0.0
        %260 = vmatpush1.msra.mxu0 %v206
        %261 = vmatprep.subr.mxu0 0.0
        %262 = vmatpush2.msra.mxu0 0.0
        %263 = vmatprep.subr.mxu0 0.0
        %264 = vmatpush2.msra.mxu0 0.0
        %265 = vmatprep.subr.mxu0 0.0
        %266 = vmatpush2.msra.mxu0 0.0
        %267 = vmatprep.subr.mxu0 0.0
        %268 = vmatpush2.msra.mxu0 0.0
        %269 = vmatprep.subr.mxu0 0.0
        %270 = vmatpush2.msra.mxu0 0.0
        %271 = vmatprep.subr.mxu0 0.0
        %272 = vmatpush2.msra.mxu0 0.0
        %273 = vmatprep.subr.mxu0 0.0
        %274 = vmatpush2.msra.mxu0 0.0
        %275 = vmatprep.subr.mxu0 0.0
        %276 = vmatpush2.msra.mxu0 0.0
        %277 = vmatprep.subr.mxu0 0.0
        %278 = vmatpush2.msra.mxu0 0.0
        %279 = vmatprep.subr.mxu0 0.0
        %280 = vmatpush2.msra.mxu0 0.0
        %281 = vmatprep.subr.mxu0 0.0
        %282 = vmatpush2.msra.mxu0 0.0
        %283 = vmatprep.subr.mxu0 0.0
        %284 = vmatpush2.msra.mxu0 0.0
        %285 = vmatprep.subr.mxu0 0.0
        %286 = vmatpush2.msra.mxu0 0.0
        %287 = vmatprep.subr.mxu0 0.0
        %288 = vmatpush2.msra.mxu0 0.0
        %289 = vmatprep.subr.mxu0 0.0
        %290 = vmatpush2.msra.mxu0 0.0
        %291 = vmatprep.subr.mxu0 0.0
        %292 = vmatpush2.msra.mxu0 0.0
        %293 = vmatprep.mubr.f32.mxu0 0.0
        %294 = vmatmul.mubr.f32.gmra.mxu0 %v205
        %v295 = vpop.f32.mrf.mxu0
        %v296 = vadd.f32 %v227, %v295
        %v297 = vpop.f32.mrf.mxu0
        %298 = vdwg.mxu0
        %v299 = vmax.f32 %v296, 0.0
        %300 = vst [vmem:[%s194] sm:$0xff] %v299
        %s301 = sand.u32 %s114, 1
        %s302 = scalar_lea.sflag [#allocation3], %s301
        %s303 = sand.u32 %s114, 1
        %s304 = smul.addr %s303, 8
        %s305 = scalar_lea.vmem [#allocation2], %s304
        // Predicated region
        $region33: #{hier_vgnn_forward.5} parent=31 // pred_check
          %p306 = pneg %p124
        $region34: #{hier_vgnn_forward.5} parent=31 // pred_check_branch
          %308 = sbr.rel (%p306) target = $region36
        $region35: #{hier_vgnn_forward.5} parent=31 // pred_region
          %s310 = ssub.s32 128, 128
          %311 = vsyncadd %s302, %s310
          %s312 = sadd.s32 %s22, %s21
          %s313 = smul.addr %s312, 128
          %s314 = scalar_lea.hbm %s3, %s313
          %s316 = sshll.u32 %s305, 4
          %s317 = int_to_ptr.vmem [resolvable:$true] %s316
          %319 = dma.vmem_to_hbm [thread:$0]  %s317, 128, %s314, %s302
        $region36: #{hier_vgnn_forward.5} parent=31 // pred_fallthru
          _
      $region32: #{hier_vgnn_forward.5} parent=5 // pred_fallthru
        _
      %p320 = scmp.le.s32.totalorder 2, %s12
      // Predicated region
      $region37: #{hier_vgnn_forward.5} parent=5 // pred_check
        %p321 = pneg %p320
      $region38: #{hier_vgnn_forward.5} parent=5 // pred_check_branch
        %323 = sbr.rel (%p321) target = $region40
      $region39: #{hier_vgnn_forward.5} parent=5 // pred_region
        %s324 = ssub.s32 %s12, 2
        // Predicated region
        $region41: #{hier_vgnn_forward.5} parent=39 // pred_check
          %p325 = pneg %p130
        $region42: #{hier_vgnn_forward.5} parent=39 // pred_check_branch
          %327 = sbr.rel (%p325) target = $region44
        $region43: #{hier_vgnn_forward.5} parent=39 // pred_region
          %s328 = sand.u32 %s115, 1
          %s329 = scalar_lea.sflag [#allocation3], %s328
          %s330 = sand.u32 %s115, 1
          %s331 = smul.addr %s330, 8
          %s332 = scalar_lea.vmem [#allocation2], %s331
          %333 = dma.done %s329, 128
        $region44: #{hier_vgnn_forward.5} parent=39 // pred_fallthru
          _
      $region40: #{hier_vgnn_forward.5} parent=5 // pred_fallthru
        _
    $region6: #{hier_vgnn_forward.5} parent=1 // loop_footer
      %s16 = sadd.s32 1, %s12
    $region7: #{hier_vgnn_forward.5} parent=1 // loop_footer_branch
      %11 = sbr.rel target = $region3
    $region8: #{hier_vgnn_forward.5} parent=1 // loop_exit
      _
    %334 = vsyncpa [#allocation3], 1
    %s335 = scalar_lea.sflag [#allocation3], 1
    %336 = vsyncpa %s335, 1

// kernel: hier_vgnn_forward.4
$region0: #{hier_vgnn_forward.4}
  #allocation0 [shape = 'u32[]', space=smem, size = 0x4, offset = 0x4, fixed_abs, tag = 'smem constant byte address 0x4 - core index']
  #allocation1 [shape = 'u32[144,128]{1,0:T(1,128)}', space=vmem, size = 0x12000, scoped, tag = 'internal scratch']
  #allocation2 [shape = 'f32[2,128]{1,0:T(2,128)}', space=vmem, size = 0x400, scoped, tag = 'scratch operand']
  %s0 = inlined_call_operand.vmem [shape: f32[2,8,128], index: 0, kind: input, shape index: {}]
  %s1 = inlined_call_operand.vmem [shape: f32[2,8,128], index: 1, kind: input, shape index: {}]
  %s2 = inlined_call_operand.vmem [shape: f32[128,16], index: 2, kind: input, shape index: {}]
  %s3 = inlined_call_operand.vmem [shape: f32[1,16], index: 3, kind: input, shape index: {}]
  %s4 = inlined_call_operand.vmem [shape: f32[128,16], index: 4, kind: input, shape index: {}]
  %s5 = inlined_call_operand.vmem [shape: f32[1,16], index: 5, kind: input, shape index: {}]
  %s6 = inlined_call_operand.vmem [shape: f32[2,16], index: 6, kind: input, shape index: {}]
  %s7 = inlined_call_operand.vmem [shape: f32[16,128], index: 7, kind: input, shape index: {}]
  %s8 = inlined_call_operand.vmem [shape: f32[1,128], index: 8, kind: input, shape index: {}]
  %s9 = inlined_call_operand.vmem [shape: f32[2,128], index: 9, kind: output, shape index: {0}]
  %s10 = inlined_call_operand.hbm [shape: f32[1], index: 10, kind: output, shape index: {1}]
  %11 = xla_tuple %s9, %s10
  %s12 = sld [smem:[#allocation0]]
  $region62: #{hier_vgnn_forward.4} parent=0
    _
  %s14 = ssub.s32 1, %s12
  %s15 = scalar_select 0, %s14, %s12
  $region1: #{hier_vgnn_forward.4} parent=0
    #allocation3 [shape = 'u8[512]{0}', space=smem, size = 0x200, scoped, tag = 'output window, operand 1, single buffered']
    #allocation4 [shape = 's32[1]{0}', space=sflag, size = 0x4, scoped, tag = 'scoped memory for hier_vgnn_forward.4']
    %16 = vsyncpa [#allocation4], 0
    // Predicated region
    $region2: #{hier_vgnn_forward.4} parent=1 // pred_check
      _
    $region3: #{hier_vgnn_forward.4} parent=1 // pred_check_branch
      %18 = sbr.rel (0) target = $region5
    $region4: #{hier_vgnn_forward.4} parent=1 // pred_region
      _
    $region5: #{hier_vgnn_forward.4} parent=1 // pred_fallthru
      _
    // Predicated region
    $region6: #{hier_vgnn_forward.4} parent=1 // pred_check
      _
    $region7: #{hier_vgnn_forward.4} parent=1 // pred_check_branch
      %20 = sbr.rel (0) target = $region9
    $region8: #{hier_vgnn_forward.4} parent=1 // pred_region
      _
    $region9: #{hier_vgnn_forward.4} parent=1 // pred_fallthru
      _
    // Predicated region
    $region10: #{hier_vgnn_forward.4} parent=1 // pred_check
      _
    $region11: #{hier_vgnn_forward.4} parent=1 // pred_check_branch
      %22 = sbr.rel (0) target = $region13
    $region12: #{hier_vgnn_forward.4} parent=1 // pred_region
      _
    $region13: #{hier_vgnn_forward.4} parent=1 // pred_fallthru
      _
    // Predicated region
    $region14: #{hier_vgnn_forward.4} parent=1 // pred_check
      _
    $region15: #{hier_vgnn_forward.4} parent=1 // pred_check_branch
      %24 = sbr.rel (0) target = $region17
    $region16: #{hier_vgnn_forward.4} parent=1 // pred_region
      _
    $region17: #{hier_vgnn_forward.4} parent=1 // pred_fallthru
      _
    // Predicated region
    $region18: #{hier_vgnn_forward.4} parent=1 // pred_check
      _
    $region19: #{hier_vgnn_forward.4} parent=1 // pred_check_branch
      %26 = sbr.rel (0) target = $region21
    $region20: #{hier_vgnn_forward.4} parent=1 // pred_region
      _
    $region21: #{hier_vgnn_forward.4} parent=1 // pred_fallthru
      _
    // Predicated region
    $region22: #{hier_vgnn_forward.4} parent=1 // pred_check
      _
    $region23: #{hier_vgnn_forward.4} parent=1 // pred_check_branch
      %28 = sbr.rel (0) target = $region25
    $region24: #{hier_vgnn_forward.4} parent=1 // pred_region
      _
    $region25: #{hier_vgnn_forward.4} parent=1 // pred_fallthru
      _
    // Predicated region
    $region26: #{hier_vgnn_forward.4} parent=1 // pred_check
      _
    $region27: #{hier_vgnn_forward.4} parent=1 // pred_check_branch
      %30 = sbr.rel (0) target = $region29
    $region28: #{hier_vgnn_forward.4} parent=1 // pred_region
      _
    $region29: #{hier_vgnn_forward.4} parent=1 // pred_fallthru
      _
    // Predicated region
    $region30: #{hier_vgnn_forward.4} parent=1 // pred_check
      _
    $region31: #{hier_vgnn_forward.4} parent=1 // pred_check_branch
      %32 = sbr.rel (0) target = $region33
    $region32: #{hier_vgnn_forward.4} parent=1 // pred_region
      _
    $region33: #{hier_vgnn_forward.4} parent=1 // pred_fallthru
      _
    // Predicated region
    $region34: #{hier_vgnn_forward.4} parent=1 // pred_check
      _
    $region35: #{hier_vgnn_forward.4} parent=1 // pred_check_branch
      %34 = sbr.rel (0) target = $region37
    $region36: #{hier_vgnn_forward.4} parent=1 // pred_region
      _
    $region37: #{hier_vgnn_forward.4} parent=1 // pred_fallthru
      _
    %p35 = scmp.eq.s32.totalorder 0, 0
    // Predicated region
    $region38: #{hier_vgnn_forward.4} parent=1 // pred_check
      %p36 = pneg %p35
    $region39: #{hier_vgnn_forward.4} parent=1 // pred_check_branch
      %38 = sbr.rel (%p36) target = $region41
    $region40: #{hier_vgnn_forward.4} parent=1 // pred_region
      %39 = vst [vmem:[#allocation2] sm:$0x3] 0.0
    $region41: #{hier_vgnn_forward.4} parent=1 // pred_fallthru
      _
    %v40 = vld [vmem:[#allocation2] sm:$0x3]
    %v41 = vld [vmem:[%s1] sm:$0xff]
    %v42 = vld [vmem:[%s1 + $0x8] sm:$0xff]
    %v43 = vld [vmem:[%s0] sm:$0xff]
    %v44 = vld [vmem:[%s0 + $0x8] sm:$0xff]
    %v45 = vsub.f32 %v41, %v43
    %v46 = vsub.f32 %v42, %v44
    %v47 = vrot.slane %v45, 4
    %v48 = vadd.f32 %v45, %v47
    %v49 = vrot.slane %v48, 2
    %v50 = vadd.f32 %v48, %v49
    %v51 = vrot.slane %v50, 1
    %v52 = vadd.f32 %v50, %v51
    %v53 = vrot.slane %v46, 4
    %v54 = vadd.f32 %v46, %v53
    %v55 = vrot.slane %v54, 2
    %v56 = vadd.f32 %v54, %v55
    %v57 = vrot.slane %v56, 1
    %v58 = vadd.f32 %v56, %v57
    %vm61 = vcmask 1041409
    %v62 = vsel %vm61, %v58, %v52
    %v64 = vadd.f32 %v40, %v62
    %65 = vst [vmem:[#allocation2] sm:$0x3] %v64
    // Predicated region
    $region42: #{hier_vgnn_forward.4} parent=1 // pred_check
      %p66 = pneg %p35
    $region43: #{hier_vgnn_forward.4} parent=1 // pred_check_branch
      %68 = sbr.rel (%p66) target = $region45
    $region44: #{hier_vgnn_forward.4} parent=1 // pred_region
      %v69 = vld [vmem:[#allocation2] sm:$0x3]
      %v70 = vld [vmem:[%s2] sm:$0xff]
      %v71 = vld [vmem:[%s2 + $0x8] sm:$0xff]
      %v72 = vld [vmem:[%s2 + $0x10] sm:$0xff]
      %v73 = vld [vmem:[%s2 + $0x18] sm:$0xff]
      %v74 = vld [vmem:[%s2 + $0x20] sm:$0xff]
      %v75 = vld [vmem:[%s2 + $0x28] sm:$0xff]
      %v76 = vld [vmem:[%s2 + $0x30] sm:$0xff]
      %v77 = vld [vmem:[%s2 + $0x38] sm:$0xff]
      %v78 = vld [vmem:[%s2 + $0x40] sm:$0xff]
      %v79 = vld [vmem:[%s2 + $0x48] sm:$0xff]
      %v80 = vld [vmem:[%s2 + $0x50] sm:$0xff]
      %v81 = vld [vmem:[%s2 + $0x58] sm:$0xff]
      %v82 = vld [vmem:[%s2 + $0x60] sm:$0xff]
      %v83 = vld [vmem:[%s2 + $0x68] sm:$0xff]
      %v84 = vld [vmem:[%s2 + $0x70] sm:$0xff]
      %v85 = vld [vmem:[%s2 + $0x78] sm:$0xff]
      %v86 = vld [vmem:[%s3] sm:$0x1]
      %v88 = vlaneseq
      %v89 = vshrl.u32 %v88, 7
      %v90 = vsub.s32 0, %v89
      %v91 = vrot.slane %v86, %v90
      %93 = vmatprep.subr.mxu0 0.0
      %94 = vmatpush1.msra.mxu0 %v85
      %95 = vmatprep.subr.mxu0 0.0
      %96 = vmatpush1.msra.mxu0 %v84
      %97 = vmatprep.subr.mxu0 0.0
      %98 = vmatpush1.msra.mxu0 %v83
      %99 = vmatprep.subr.mxu0 0.0
      %100 = vmatpush1.msra.mxu0 %v82
      %101 = vmatprep.subr.mxu0 0.0
      %102 = vmatpush1.msra.mxu0 %v81
      %103 = vmatprep.subr.mxu0 0.0
      %104 = vmatpush1.msra.mxu0 %v80
      %105 = vmatprep.subr.mxu0 0.0
      %106 = vmatpush1.msra.mxu0 %v79
      %107 = vmatprep.subr.mxu0 0.0
      %108 = vmatpush1.msra.mxu0 %v78
      %109 = vmatprep.subr.mxu0 0.0
      %110 = vmatpush1.msra.mxu0 %v77
      %111 = vmatprep.subr.mxu0 0.0
      %112 = vmatpush1.msra.mxu0 %v76
      %113 = vmatprep.subr.mxu0 0.0
      %114 = vmatpush1.msra.mxu0 %v75
      %115 = vmatprep.subr.mxu0 0.0
      %116 = vmatpush1.msra.mxu0 %v74
      %117 = vmatprep.subr.mxu0 0.0
      %118 = vmatpush1.msra.mxu0 %v73
      %119 = vmatprep.subr.mxu0 0.0
      %120 = vmatpush1.msra.mxu0 %v72
      %121 = vmatprep.subr.mxu0 0.0
      %122 = vmatpush1.msra.mxu0 %v71
      %123 = vmatprep.subr.mxu0 0.0
      %124 = vmatpush1.msra.mxu0 %v70
      %125 = vmatprep.subr.mxu0 0.0
      %126 = vmatpush2.msra.mxu0 0.0
      %127 = vmatprep.subr.mxu0 0.0
      %128 = vmatpush2.msra.mxu0 0.0
      %129 = vmatprep.subr.mxu0 0.0
      %130 = vmatpush2.msra.mxu0 0.0
      %131 = vmatprep.subr.mxu0 0.0
      %132 = vmatpush2.msra.mxu0 0.0
      %133 = vmatprep.subr.mxu0 0.0
      %134 = vmatpush2.msra.mxu0 0.0
      %135 = vmatprep.subr.mxu0 0.0
      %136 = vmatpush2.msra.mxu0 0.0
      %137 = vmatprep.subr.mxu0 0.0
      %138 = vmatpush2.msra.mxu0 0.0
      %139 = vmatprep.subr.mxu0 0.0
      %140 = vmatpush2.msra.mxu0 0.0
      %141 = vmatprep.subr.mxu0 0.0
      %142 = vmatpush2.msra.mxu0 0.0
      %143 = vmatprep.subr.mxu0 0.0
      %144 = vmatpush2.msra.mxu0 0.0
      %145 = vmatprep.subr.mxu0 0.0
      %146 = vmatpush2.msra.mxu0 0.0
      %147 = vmatprep.subr.mxu0 0.0
      %148 = vmatpush2.msra.mxu0 0.0
      %149 = vmatprep.subr.mxu0 0.0
      %150 = vmatpush2.msra.mxu0 0.0
      %151 = vmatprep.subr.mxu0 0.0
      %152 = vmatpush2.msra.mxu0 0.0
      %153 = vmatprep.subr.mxu0 0.0
      %154 = vmatpush2.msra.mxu0 0.0
      %155 = vmatprep.subr.mxu0 0.0
      %156 = vmatpush2.msra.mxu0 0.0
      %157 = vmatprep.mubr.f32.mxu0 0.0
      %158 = vmatmul.mubr.f32.gmra.mxu0 %v69
      %v159 = vpop.f32.mrf.mxu0
      %v160 = vadd.f32 %v91, %v159
      %v161 = vpop.f32.mrf.mxu0
      %162 = vdwg.mxu0
      %v163 = vld [vmem:[%s4] sm:$0xff]
      %v164 = vld [vmem:[%s4 + $0x8] sm:$0xff]
      %v165 = vld [vmem:[%s4 + $0x10] sm:$0xff]
      %v166 = vld [vmem:[%s4 + $0x18] sm:$0xff]
      %v167 = vld [vmem:[%s4 + $0x20] sm:$0xff]
      %v168 = vld [vmem:[%s4 + $0x28] sm:$0xff]
      %v169 = vld [vmem:[%s4 + $0x30] sm:$0xff]
      %v170 = vld [vmem:[%s4 + $0x38] sm:$0xff]
      %v171 = vld [vmem:[%s4 + $0x40] sm:$0xff]
      %v172 = vld [vmem:[%s4 + $0x48] sm:$0xff]
      %v173 = vld [vmem:[%s4 + $0x50] sm:$0xff]
      %v174 = vld [vmem:[%s4 + $0x58] sm:$0xff]
      %v175 = vld [vmem:[%s4 + $0x60] sm:$0xff]
      %v176 = vld [vmem:[%s4 + $0x68] sm:$0xff]
      %v177 = vld [vmem:[%s4 + $0x70] sm:$0xff]
      %v178 = vld [vmem:[%s4 + $0x78] sm:$0xff]
      %v179 = vld [vmem:[%s5] sm:$0x1]
      %v181 = vlaneseq
      %v182 = vshrl.u32 %v181, 7
      %v183 = vsub.s32 0, %v182
      %v184 = vrot.slane %v179, %v183
      %186 = vmatprep.subr.mxu0 0.0
      %187 = vmatpush1.msra.mxu0 %v178
      %188 = vmatprep.subr.mxu0 0.0
      %189 = vmatpush1.msra.mxu0 %v177
      %190 = vmatprep.subr.mxu0 0.0
      %191 = vmatpush1.msra.mxu0 %v176
      %192 = vmatprep.subr.mxu0 0.0
      %193 = vmatpush1.msra.mxu0 %v175
      %194 = vmatprep.subr.mxu0 0.0
      %195 = vmatpush1.msra.mxu0 %v174
      %196 = vmatprep.subr.mxu0 0.0
      %197 = vmatpush1.msra.mxu0 %v173
      %198 = vmatprep.subr.mxu0 0.0
      %199 = vmatpush1.msra.mxu0 %v172
      %200 = vmatprep.subr.mxu0 0.0
      %201 = vmatpush1.msra.mxu0 %v171
      %202 = vmatprep.subr.mxu0 0.0
      %203 = vmatpush1.msra.mxu0 %v170
      %204 = vmatprep.subr.mxu0 0.0
      %205 = vmatpush1.msra.mxu0 %v169
      %206 = vmatprep.subr.mxu0 0.0
      %207 = vmatpush1.msra.mxu0 %v168
      %208 = vmatprep.subr.mxu0 0.0
      %209 = vmatpush1.msra.mxu0 %v167
      %210 = vmatprep.subr.mxu0 0.0
      %211 = vmatpush1.msra.mxu0 %v166
      %212 = vmatprep.subr.mxu0 0.0
      %213 = vmatpush1.msra.mxu0 %v165
      %214 = vmatprep.subr.mxu0 0.0
      %215 = vmatpush1.msra.mxu0 %v164
      %216 = vmatprep.subr.mxu0 0.0
      %217 = vmatpush1.msra.mxu0 %v163
      %218 = vmatprep.subr.mxu0 0.0
      %219 = vmatpush2.msra.mxu0 0.0
      %220 = vmatprep.subr.mxu0 0.0
      %221 = vmatpush2.msra.mxu0 0.0
      %222 = vmatprep.subr.mxu0 0.0
      %223 = vmatpush2.msra.mxu0 0.0
      %224 = vmatprep.subr.mxu0 0.0
      %225 = vmatpush2.msra.mxu0 0.0
      %226 = vmatprep.subr.mxu0 0.0
      %227 = vmatpush2.msra.mxu0 0.0
      %228 = vmatprep.subr.mxu0 0.0
      %229 = vmatpush2.msra.mxu0 0.0
      %230 = vmatprep.subr.mxu0 0.0
      %231 = vmatpush2.msra.mxu0 0.0
      %232 = vmatprep.subr.mxu0 0.0
      %233 = vmatpush2.msra.mxu0 0.0
      %234 = vmatprep.subr.mxu0 0.0
      %235 = vmatpush2.msra.mxu0 0.0
      %236 = vmatprep.subr.mxu0 0.0
      %237 = vmatpush2.msra.mxu0 0.0
      %238 = vmatprep.subr.mxu0 0.0
      %239 = vmatpush2.msra.mxu0 0.0
      %240 = vmatprep.subr.mxu0 0.0
      %241 = vmatpush2.msra.mxu0 0.0
      %242 = vmatprep.subr.mxu0 0.0
      %243 = vmatpush2.msra.mxu0 0.0
      %244 = vmatprep.subr.mxu0 0.0
      %245 = vmatpush2.msra.mxu0 0.0
      %246 = vmatprep.subr.mxu0 0.0
      %247 = vmatpush2.msra.mxu0 0.0
      %248 = vmatprep.subr.mxu0 0.0
      %249 = vmatpush2.msra.mxu0 0.0
      %250 = vmatprep.mubr.f32.mxu0 0.0
      %251 = vmatmul.mubr.f32.gmra.mxu0 %v69
      %v252 = vpop.f32.mrf.mxu0
      %v253 = vadd.f32 %v184, %v252
      %v254 = vpop.f32.mrf.mxu0
      %255 = vdwg.mxu0
      %v256 = vand.u32 2147483647, %v253
      %v257 = vsub.f32 0.0, %v256
      %v258 = vadd.f32 %v257, 1.0
      %v259 = vmul.f32 %v160, %v160
      %v260 = vsub.f32 %v258, %v259
      %v261 = vmul.f32 %v257, 1.442695
      %v262 = vpow.pop %v261
      %v263 = vsub.f32 %v260, %v262
      %vm264 = vcmask 123904
      %v265 = vsel %vm264, %v263, 0.0
      %266 = vadd.xlane.f32.xlu0 %v265
      %v267 = vpop.xlane.xlu0 %266
      %v268 = vrot.slane %v267, 4
      %v269 = vadd.f32 %v267, %v268
      %v270 = vrot.slane %v269, 2
      %v271 = vadd.f32 %v269, %v270
      %v272 = vrot.slane %v271, 1
      %v273 = vadd.f32 %v271, %v272
      %s274 = vtos %v273
      %s275 = smul.f32 %s274, -0.5
      %v276 = vrcp.pop 2.0
      %s277 = vtos %v276
      %s278 = smul.f32 %s275, %s277
      %s279 = scalar_lea.smem [#allocation3], 0
      %280 = sst [smem:[%s279]] %s278
      %v281 = vmul.f32 %v257, 0.5
      %v282 = vmul.f32 %v281, 1.442695
      %v283 = vpow.pop %v282
      %v284 = vld [vmem:[%s6] sm:$0x3]
      %v285 = vmul.f32 %v283, %v284
      %v286 = vadd.f32 %v160, %v285
      %v287 = vld [vmem:[%s7] sm:$0xff]
      %v288 = vld [vmem:[%s7 + $0x8] sm:$0xff]
      %v289 = vld [vmem:[%s8] sm:$0x1]
      %v291 = vlaneseq
      %v292 = vshrl.u32 %v291, 7
      %v293 = vsub.s32 0, %v292
      %v294 = vrot.slane %v289, %v293
      %vm296 = vcmask 130048
      %v298 = vsel %vm296, %v286, 0
      %300 = vmatprep.subr.mxu0 0.0
      %301 = vmatpush1.msra.mxu0 0.0
      %302 = vmatprep.subr.mxu0 0.0
      %303 = vmatpush1.msra.mxu0 0.0
      %304 = vmatprep.subr.mxu0 0.0
      %305 = vmatpush1.msra.mxu0 0.0
      %306 = vmatprep.subr.mxu0 0.0
      %307 = vmatpush1.msra.mxu0 0.0
      %308 = vmatprep.subr.mxu0 0.0
      %309 = vmatpush1.msra.mxu0 0.0
      %310 = vmatprep.subr.mxu0 0.0
      %311 = vmatpush1.msra.mxu0 0.0
      %312 = vmatprep.subr.mxu0 0.0
      %313 = vmatpush1.msra.mxu0 0.0
      %314 = vmatprep.subr.mxu0 0.0
      %315 = vmatpush1.msra.mxu0 0.0
      %316 = vmatprep.subr.mxu0 0.0
      %317 = vmatpush1.msra.mxu0 0.0
      %318 = vmatprep.subr.mxu0 0.0
      %319 = vmatpush1.msra.mxu0 0.0
      %320 = vmatprep.subr.mxu0 0.0
      %321 = vmatpush1.msra.mxu0 0.0
      %322 = vmatprep.subr.mxu0 0.0
      %323 = vmatpush1.msra.mxu0 0.0
      %324 = vmatprep.subr.mxu0 0.0
      %325 = vmatpush1.msra.mxu0 0.0
      %326 = vmatprep.subr.mxu0 0.0
      %327 = vmatpush1.msra.mxu0 0.0
      %328 = vmatprep.subr.mxu0 0.0
      %329 = vmatpush1.msra.mxu0 %v288
      %330 = vmatprep.subr.mxu0 0.0
      %331 = vmatpush1.msra.mxu0 %v287
      %332 = vmatprep.subr.mxu0 0.0
      %333 = vmatpush2.msra.mxu0 0.0
      %334 = vmatprep.subr.mxu0 0.0
      %335 = vmatpush2.msra.mxu0 0.0
      %336 = vmatprep.subr.mxu0 0.0
      %337 = vmatpush2.msra.mxu0 0.0
      %338 = vmatprep.subr.mxu0 0.0
      %339 = vmatpush2.msra.mxu0 0.0
      %340 = vmatprep.subr.mxu0 0.0
      %341 = vmatpush2.msra.mxu0 0.0
      %342 = vmatprep.subr.mxu0 0.0
      %343 = vmatpush2.msra.mxu0 0.0
      %344 = vmatprep.subr.mxu0 0.0
      %345 = vmatpush2.msra.mxu0 0.0
      %346 = vmatprep.subr.mxu0 0.0
      %347 = vmatpush2.msra.mxu0 0.0
      %348 = vmatprep.subr.mxu0 0.0
      %349 = vmatpush2.msra.mxu0 0.0
      %350 = vmatprep.subr.mxu0 0.0
      %351 = vmatpush2.msra.mxu0 0.0
      %352 = vmatprep.subr.mxu0 0.0
      %353 = vmatpush2.msra.mxu0 0.0
      %354 = vmatprep.subr.mxu0 0.0
      %355 = vmatpush2.msra.mxu0 0.0
      %356 = vmatprep.subr.mxu0 0.0
      %357 = vmatpush2.msra.mxu0 0.0
      %358 = vmatprep.subr.mxu0 0.0
      %359 = vmatpush2.msra.mxu0 0.0
      %360 = vmatprep.subr.mxu0 0.0
      %361 = vmatpush2.msra.mxu0 0.0
      %362 = vmatprep.subr.mxu0 0.0
      %363 = vmatpush2.msra.mxu0 0.0
      %364 = vmatprep.mubr.f32.mxu0 0.0
      %365 = vmatmul.mubr.f32.gmra.mxu0 %v298
      %v366 = vpop.f32.mrf.mxu0
      %v367 = vadd.f32 %v294, %v366
      %v368 = vpop.f32.mrf.mxu0
      %369 = vdwg.mxu0
      %370 = vst [vmem:[%s9] sm:$0x3] %v367
    $region45: #{hier_vgnn_forward.4} parent=1 // pred_fallthru
      _
    // Predicated region
    $region46: #{hier_vgnn_forward.4} parent=1 // pred_check
      _
    $region47: #{hier_vgnn_forward.4} parent=1 // pred_check_branch
      %372 = sbr.rel (0) target = $region49
    $region48: #{hier_vgnn_forward.4} parent=1 // pred_region
      _
    $region49: #{hier_vgnn_forward.4} parent=1 // pred_fallthru
      _
    // Predicated region
    $region50: #{hier_vgnn_forward.4} parent=1 // pred_check
      _
    $region51: #{hier_vgnn_forward.4} parent=1 // pred_check_branch
      %374 = sbr.rel (0) target = $region53
    $region52: #{hier_vgnn_forward.4} parent=1 // pred_region
      %s376 = ssub.s32 16, 16
      %377 = vsyncadd [#allocation4], %s376
      %380 = dma.smem_to_hbm [#allocation3], 16, %s10, [#allocation4]
    $region53: #{hier_vgnn_forward.4} parent=1 // pred_fallthru
      _
    // Predicated region
    $region54: #{hier_vgnn_forward.4} parent=1 // pred_check
      _
    $region55: #{hier_vgnn_forward.4} parent=1 // pred_check_branch
      %382 = sbr.rel (0) target = $region57
    $region56: #{hier_vgnn_forward.4} parent=1 // pred_region
      _
    $region57: #{hier_vgnn_forward.4} parent=1 // pred_fallthru
      _
    // Predicated region
    $region58: #{hier_vgnn_forward.4} parent=1 // pred_check
      _
    $region59: #{hier_vgnn_forward.4} parent=1 // pred_check_branch
      %384 = sbr.rel (0) target = $region61
    $region60: #{hier_vgnn_forward.4} parent=1 // pred_region
      %385 = dma.done [#allocation4], 16
    $region61: #{hier_vgnn_forward.4} parent=1 // pred_fallthru
      _
    %386 = sfence
    %387 = vsyncpa [#allocation4], 1

// kernel: hier_vgnn_forward.6
$region0: #{hier_vgnn_forward.6}
  #allocation0 [shape = 'u32[]', space=smem, size = 0x4, offset = 0x4, fixed_abs, tag = 'smem constant byte address 0x4 - core index']
  #allocation1 [shape = 'u32[144,128]{1,0:T(1,128)}', space=vmem, size = 0x12000, scoped, tag = 'internal scratch']
  #allocation2 [shape = 'f32[2,128]{1,0:T(2,128)}', space=vmem, size = 0x400, scoped, tag = 'scratch operand']
  %s0 = inlined_call_operand.vmem [shape: f32[2,16,128], index: 0, kind: input, shape index: {}]
  %s1 = inlined_call_operand.vmem [shape: f32[2,16,128], index: 1, kind: input, shape index: {}]
  %s2 = inlined_call_operand.vmem [shape: f32[128,16], index: 2, kind: input, shape index: {}]
  %s3 = inlined_call_operand.vmem [shape: f32[1,16], index: 3, kind: input, shape index: {}]
  %s4 = inlined_call_operand.vmem [shape: f32[128,16], index: 4, kind: input, shape index: {}]
  %s5 = inlined_call_operand.vmem [shape: f32[1,16], index: 5, kind: input, shape index: {}]
  %s6 = inlined_call_operand.vmem [shape: f32[2,16], index: 6, kind: input, shape index: {}]
  %s7 = inlined_call_operand.vmem [shape: f32[16,128], index: 7, kind: input, shape index: {}]
  %s8 = inlined_call_operand.vmem [shape: f32[1,128], index: 8, kind: input, shape index: {}]
  %s9 = inlined_call_operand.vmem [shape: f32[2,128], index: 9, kind: output, shape index: {0}]
  %s10 = inlined_call_operand.hbm [shape: f32[1], index: 10, kind: output, shape index: {1}]
  %11 = xla_tuple %s9, %s10
  %s12 = sld [smem:[#allocation0]]
  $region62: #{hier_vgnn_forward.6} parent=0
    _
  %s14 = ssub.s32 1, %s12
  %s15 = scalar_select 0, %s14, %s12
  $region1: #{hier_vgnn_forward.6} parent=0
    #allocation3 [shape = 'u8[512]{0}', space=smem, size = 0x200, scoped, tag = 'output window, operand 1, single buffered']
    #allocation4 [shape = 's32[1]{0}', space=sflag, size = 0x4, scoped, tag = 'scoped memory for hier_vgnn_forward.6']
    %16 = vsyncpa [#allocation4], 0
    // Predicated region
    $region2: #{hier_vgnn_forward.6} parent=1 // pred_check
      _
    $region3: #{hier_vgnn_forward.6} parent=1 // pred_check_branch
      %18 = sbr.rel (0) target = $region5
    $region4: #{hier_vgnn_forward.6} parent=1 // pred_region
      _
    $region5: #{hier_vgnn_forward.6} parent=1 // pred_fallthru
      _
    // Predicated region
    $region6: #{hier_vgnn_forward.6} parent=1 // pred_check
      _
    $region7: #{hier_vgnn_forward.6} parent=1 // pred_check_branch
      %20 = sbr.rel (0) target = $region9
    $region8: #{hier_vgnn_forward.6} parent=1 // pred_region
      _
    $region9: #{hier_vgnn_forward.6} parent=1 // pred_fallthru
      _
    // Predicated region
    $region10: #{hier_vgnn_forward.6} parent=1 // pred_check
      _
    $region11: #{hier_vgnn_forward.6} parent=1 // pred_check_branch
      %22 = sbr.rel (0) target = $region13
    $region12: #{hier_vgnn_forward.6} parent=1 // pred_region
      _
    $region13: #{hier_vgnn_forward.6} parent=1 // pred_fallthru
      _
    // Predicated region
    $region14: #{hier_vgnn_forward.6} parent=1 // pred_check
      _
    $region15: #{hier_vgnn_forward.6} parent=1 // pred_check_branch
      %24 = sbr.rel (0) target = $region17
    $region16: #{hier_vgnn_forward.6} parent=1 // pred_region
      _
    $region17: #{hier_vgnn_forward.6} parent=1 // pred_fallthru
      _
    // Predicated region
    $region18: #{hier_vgnn_forward.6} parent=1 // pred_check
      _
    $region19: #{hier_vgnn_forward.6} parent=1 // pred_check_branch
      %26 = sbr.rel (0) target = $region21
    $region20: #{hier_vgnn_forward.6} parent=1 // pred_region
      _
    $region21: #{hier_vgnn_forward.6} parent=1 // pred_fallthru
      _
    // Predicated region
    $region22: #{hier_vgnn_forward.6} parent=1 // pred_check
      _
    $region23: #{hier_vgnn_forward.6} parent=1 // pred_check_branch
      %28 = sbr.rel (0) target = $region25
    $region24: #{hier_vgnn_forward.6} parent=1 // pred_region
      _
    $region25: #{hier_vgnn_forward.6} parent=1 // pred_fallthru
      _
    // Predicated region
    $region26: #{hier_vgnn_forward.6} parent=1 // pred_check
      _
    $region27: #{hier_vgnn_forward.6} parent=1 // pred_check_branch
      %30 = sbr.rel (0) target = $region29
    $region28: #{hier_vgnn_forward.6} parent=1 // pred_region
      _
    $region29: #{hier_vgnn_forward.6} parent=1 // pred_fallthru
      _
    // Predicated region
    $region30: #{hier_vgnn_forward.6} parent=1 // pred_check
      _
    $region31: #{hier_vgnn_forward.6} parent=1 // pred_check_branch
      %32 = sbr.rel (0) target = $region33
    $region32: #{hier_vgnn_forward.6} parent=1 // pred_region
      _
    $region33: #{hier_vgnn_forward.6} parent=1 // pred_fallthru
      _
    // Predicated region
    $region34: #{hier_vgnn_forward.6} parent=1 // pred_check
      _
    $region35: #{hier_vgnn_forward.6} parent=1 // pred_check_branch
      %34 = sbr.rel (0) target = $region37
    $region36: #{hier_vgnn_forward.6} parent=1 // pred_region
      _
    $region37: #{hier_vgnn_forward.6} parent=1 // pred_fallthru
      _
    %p35 = scmp.eq.s32.totalorder 0, 0
    // Predicated region
    $region38: #{hier_vgnn_forward.6} parent=1 // pred_check
      %p36 = pneg %p35
    $region39: #{hier_vgnn_forward.6} parent=1 // pred_check_branch
      %38 = sbr.rel (%p36) target = $region41
    $region40: #{hier_vgnn_forward.6} parent=1 // pred_region
      %39 = vst [vmem:[#allocation2] sm:$0x3] 0.0
    $region41: #{hier_vgnn_forward.6} parent=1 // pred_fallthru
      _
    %v40 = vld [vmem:[#allocation2] sm:$0x3]
    %v41 = vld [vmem:[%s1] sm:$0xff]
    %v42 = vld [vmem:[%s1 + $0x8] sm:$0xff]
    %v43 = vld [vmem:[%s1 + $0x10] sm:$0xff]
    %v44 = vld [vmem:[%s1 + $0x18] sm:$0xff]
    %v45 = vld [vmem:[%s0] sm:$0xff]
    %v46 = vld [vmem:[%s0 + $0x8] sm:$0xff]
    %v47 = vld [vmem:[%s0 + $0x10] sm:$0xff]
    %v48 = vld [vmem:[%s0 + $0x18] sm:$0xff]
    %v49 = vsub.f32 %v41, %v45
    %v50 = vsub.f32 %v42, %v46
    %v51 = vsub.f32 %v43, %v47
    %v52 = vsub.f32 %v44, %v48
    %v53 = vadd.f32 %v49, %v50
    %v54 = vrot.slane %v53, 4
    %v55 = vadd.f32 %v53, %v54
    %v56 = vrot.slane %v55, 2
    %v57 = vadd.f32 %v55, %v56
    %v58 = vrot.slane %v57, 1
    %v59 = vadd.f32 %v57, %v58
    %v60 = vadd.f32 %v51, %v52
    %v61 = vrot.slane %v60, 4
    %v62 = vadd.f32 %v60, %v61
    %v63 = vrot.slane %v62, 2
    %v64 = vadd.f32 %v62, %v63
    %v65 = vrot.slane %v64, 1
    %v66 = vadd.f32 %v64, %v65
    %vm69 = vcmask 1041409
    %v70 = vsel %vm69, %v66, %v59
    %v72 = vadd.f32 %v40, %v70
    %73 = vst [vmem:[#allocation2] sm:$0x3] %v72
    // Predicated region
    $region42: #{hier_vgnn_forward.6} parent=1 // pred_check
      %p74 = pneg %p35
    $region43: #{hier_vgnn_forward.6} parent=1 // pred_check_branch
      %76 = sbr.rel (%p74) target = $region45
    $region44: #{hier_vgnn_forward.6} parent=1 // pred_region
      %v77 = vld [vmem:[#allocation2] sm:$0x3]
      %v78 = vld [vmem:[%s2] sm:$0xff]
      %v79 = vld [vmem:[%s2 + $0x8] sm:$0xff]
      %v80 = vld [vmem:[%s2 + $0x10] sm:$0xff]
      %v81 = vld [vmem:[%s2 + $0x18] sm:$0xff]
      %v82 = vld [vmem:[%s2 + $0x20] sm:$0xff]
      %v83 = vld [vmem:[%s2 + $0x28] sm:$0xff]
      %v84 = vld [vmem:[%s2 + $0x30] sm:$0xff]
      %v85 = vld [vmem:[%s2 + $0x38] sm:$0xff]
      %v86 = vld [vmem:[%s2 + $0x40] sm:$0xff]
      %v87 = vld [vmem:[%s2 + $0x48] sm:$0xff]
      %v88 = vld [vmem:[%s2 + $0x50] sm:$0xff]
      %v89 = vld [vmem:[%s2 + $0x58] sm:$0xff]
      %v90 = vld [vmem:[%s2 + $0x60] sm:$0xff]
      %v91 = vld [vmem:[%s2 + $0x68] sm:$0xff]
      %v92 = vld [vmem:[%s2 + $0x70] sm:$0xff]
      %v93 = vld [vmem:[%s2 + $0x78] sm:$0xff]
      %v94 = vld [vmem:[%s3] sm:$0x1]
      %v96 = vlaneseq
      %v97 = vshrl.u32 %v96, 7
      %v98 = vsub.s32 0, %v97
      %v99 = vrot.slane %v94, %v98
      %101 = vmatprep.subr.mxu0 0.0
      %102 = vmatpush1.msra.mxu0 %v93
      %103 = vmatprep.subr.mxu0 0.0
      %104 = vmatpush1.msra.mxu0 %v92
      %105 = vmatprep.subr.mxu0 0.0
      %106 = vmatpush1.msra.mxu0 %v91
      %107 = vmatprep.subr.mxu0 0.0
      %108 = vmatpush1.msra.mxu0 %v90
      %109 = vmatprep.subr.mxu0 0.0
      %110 = vmatpush1.msra.mxu0 %v89
      %111 = vmatprep.subr.mxu0 0.0
      %112 = vmatpush1.msra.mxu0 %v88
      %113 = vmatprep.subr.mxu0 0.0
      %114 = vmatpush1.msra.mxu0 %v87
      %115 = vmatprep.subr.mxu0 0.0
      %116 = vmatpush1.msra.mxu0 %v86
      %117 = vmatprep.subr.mxu0 0.0
      %118 = vmatpush1.msra.mxu0 %v85
      %119 = vmatprep.subr.mxu0 0.0
      %120 = vmatpush1.msra.mxu0 %v84
      %121 = vmatprep.subr.mxu0 0.0
      %122 = vmatpush1.msra.mxu0 %v83
      %123 = vmatprep.subr.mxu0 0.0
      %124 = vmatpush1.msra.mxu0 %v82
      %125 = vmatprep.subr.mxu0 0.0
      %126 = vmatpush1.msra.mxu0 %v81
      %127 = vmatprep.subr.mxu0 0.0
      %128 = vmatpush1.msra.mxu0 %v80
      %129 = vmatprep.subr.mxu0 0.0
      %130 = vmatpush1.msra.mxu0 %v79
      %131 = vmatprep.subr.mxu0 0.0
      %132 = vmatpush1.msra.mxu0 %v78
      %133 = vmatprep.subr.mxu0 0.0
      %134 = vmatpush2.msra.mxu0 0.0
      %135 = vmatprep.subr.mxu0 0.0
      %136 = vmatpush2.msra.mxu0 0.0
      %137 = vmatprep.subr.mxu0 0.0
      %138 = vmatpush2.msra.mxu0 0.0
      %139 = vmatprep.subr.mxu0 0.0
      %140 = vmatpush2.msra.mxu0 0.0
      %141 = vmatprep.subr.mxu0 0.0
      %142 = vmatpush2.msra.mxu0 0.0
      %143 = vmatprep.subr.mxu0 0.0
      %144 = vmatpush2.msra.mxu0 0.0
      %145 = vmatprep.subr.mxu0 0.0
      %146 = vmatpush2.msra.mxu0 0.0
      %147 = vmatprep.subr.mxu0 0.0
      %148 = vmatpush2.msra.mxu0 0.0
      %149 = vmatprep.subr.mxu0 0.0
      %150 = vmatpush2.msra.mxu0 0.0
      %151 = vmatprep.subr.mxu0 0.0
      %152 = vmatpush2.msra.mxu0 0.0
      %153 = vmatprep.subr.mxu0 0.0
      %154 = vmatpush2.msra.mxu0 0.0
      %155 = vmatprep.subr.mxu0 0.0
      %156 = vmatpush2.msra.mxu0 0.0
      %157 = vmatprep.subr.mxu0 0.0
      %158 = vmatpush2.msra.mxu0 0.0
      %159 = vmatprep.subr.mxu0 0.0
      %160 = vmatpush2.msra.mxu0 0.0
      %161 = vmatprep.subr.mxu0 0.0
      %162 = vmatpush2.msra.mxu0 0.0
      %163 = vmatprep.subr.mxu0 0.0
      %164 = vmatpush2.msra.mxu0 0.0
      %165 = vmatprep.mubr.f32.mxu0 0.0
      %166 = vmatmul.mubr.f32.gmra.mxu0 %v77
      %v167 = vpop.f32.mrf.mxu0
      %v168 = vadd.f32 %v99, %v167
      %v169 = vpop.f32.mrf.mxu0
      %170 = vdwg.mxu0
      %v171 = vld [vmem:[%s4] sm:$0xff]
      %v172 = vld [vmem:[%s4 + $0x8] sm:$0xff]
      %v173 = vld [vmem:[%s4 + $0x10] sm:$0xff]
      %v174 = vld [vmem:[%s4 + $0x18] sm:$0xff]
      %v175 = vld [vmem:[%s4 + $0x20] sm:$0xff]
      %v176 = vld [vmem:[%s4 + $0x28] sm:$0xff]
      %v177 = vld [vmem:[%s4 + $0x30] sm:$0xff]
      %v178 = vld [vmem:[%s4 + $0x38] sm:$0xff]
      %v179 = vld [vmem:[%s4 + $0x40] sm:$0xff]
      %v180 = vld [vmem:[%s4 + $0x48] sm:$0xff]
      %v181 = vld [vmem:[%s4 + $0x50] sm:$0xff]
      %v182 = vld [vmem:[%s4 + $0x58] sm:$0xff]
      %v183 = vld [vmem:[%s4 + $0x60] sm:$0xff]
      %v184 = vld [vmem:[%s4 + $0x68] sm:$0xff]
      %v185 = vld [vmem:[%s4 + $0x70] sm:$0xff]
      %v186 = vld [vmem:[%s4 + $0x78] sm:$0xff]
      %v187 = vld [vmem:[%s5] sm:$0x1]
      %v189 = vlaneseq
      %v190 = vshrl.u32 %v189, 7
      %v191 = vsub.s32 0, %v190
      %v192 = vrot.slane %v187, %v191
      %194 = vmatprep.subr.mxu0 0.0
      %195 = vmatpush1.msra.mxu0 %v186
      %196 = vmatprep.subr.mxu0 0.0
      %197 = vmatpush1.msra.mxu0 %v185
      %198 = vmatprep.subr.mxu0 0.0
      %199 = vmatpush1.msra.mxu0 %v184
      %200 = vmatprep.subr.mxu0 0.0
      %201 = vmatpush1.msra.mxu0 %v183
      %202 = vmatprep.subr.mxu0 0.0
      %203 = vmatpush1.msra.mxu0 %v182
      %204 = vmatprep.subr.mxu0 0.0
      %205 = vmatpush1.msra.mxu0 %v181
      %206 = vmatprep.subr.mxu0 0.0
      %207 = vmatpush1.msra.mxu0 %v180
      %208 = vmatprep.subr.mxu0 0.0
      %209 = vmatpush1.msra.mxu0 %v179
      %210 = vmatprep.subr.mxu0 0.0
      %211 = vmatpush1.msra.mxu0 %v178
      %212 = vmatprep.subr.mxu0 0.0
      %213 = vmatpush1.msra.mxu0 %v177
      %214 = vmatprep.subr.mxu0 0.0
      %215 = vmatpush1.msra.mxu0 %v176
      %216 = vmatprep.subr.mxu0 0.0
      %217 = vmatpush1.msra.mxu0 %v175
      %218 = vmatprep.subr.mxu0 0.0
      %219 = vmatpush1.msra.mxu0 %v174
      %220 = vmatprep.subr.mxu0 0.0
      %221 = vmatpush1.msra.mxu0 %v173
      %222 = vmatprep.subr.mxu0 0.0
      %223 = vmatpush1.msra.mxu0 %v172
      %224 = vmatprep.subr.mxu0 0.0
      %225 = vmatpush1.msra.mxu0 %v171
      %226 = vmatprep.subr.mxu0 0.0
      %227 = vmatpush2.msra.mxu0 0.0
      %228 = vmatprep.subr.mxu0 0.0
      %229 = vmatpush2.msra.mxu0 0.0
      %230 = vmatprep.subr.mxu0 0.0
      %231 = vmatpush2.msra.mxu0 0.0
      %232 = vmatprep.subr.mxu0 0.0
      %233 = vmatpush2.msra.mxu0 0.0
      %234 = vmatprep.subr.mxu0 0.0
      %235 = vmatpush2.msra.mxu0 0.0
      %236 = vmatprep.subr.mxu0 0.0
      %237 = vmatpush2.msra.mxu0 0.0
      %238 = vmatprep.subr.mxu0 0.0
      %239 = vmatpush2.msra.mxu0 0.0
      %240 = vmatprep.subr.mxu0 0.0
      %241 = vmatpush2.msra.mxu0 0.0
      %242 = vmatprep.subr.mxu0 0.0
      %243 = vmatpush2.msra.mxu0 0.0
      %244 = vmatprep.subr.mxu0 0.0
      %245 = vmatpush2.msra.mxu0 0.0
      %246 = vmatprep.subr.mxu0 0.0
      %247 = vmatpush2.msra.mxu0 0.0
      %248 = vmatprep.subr.mxu0 0.0
      %249 = vmatpush2.msra.mxu0 0.0
      %250 = vmatprep.subr.mxu0 0.0
      %251 = vmatpush2.msra.mxu0 0.0
      %252 = vmatprep.subr.mxu0 0.0
      %253 = vmatpush2.msra.mxu0 0.0
      %254 = vmatprep.subr.mxu0 0.0
      %255 = vmatpush2.msra.mxu0 0.0
      %256 = vmatprep.subr.mxu0 0.0
      %257 = vmatpush2.msra.mxu0 0.0
      %258 = vmatprep.mubr.f32.mxu0 0.0
      %259 = vmatmul.mubr.f32.gmra.mxu0 %v77
      %v260 = vpop.f32.mrf.mxu0
      %v261 = vadd.f32 %v192, %v260
      %v262 = vpop.f32.mrf.mxu0
      %263 = vdwg.mxu0
      %v264 = vand.u32 2147483647, %v261
      %v265 = vsub.f32 0.0, %v264
      %v266 = vadd.f32 %v265, 1.0
      %v267 = vmul.f32 %v168, %v168
      %v268 = vsub.f32 %v266, %v267
      %v269 = vmul.f32 %v265, 1.442695
      %v270 = vpow.pop %v269
      %v271 = vsub.f32 %v268, %v270
      %vm272 = vcmask 123904
      %v273 = vsel %vm272, %v271, 0.0
      %274 = vadd.xlane.f32.xlu0 %v273
      %v275 = vpop.xlane.xlu0 %274
      %v276 = vrot.slane %v275, 4
      %v277 = vadd.f32 %v275, %v276
      %v278 = vrot.slane %v277, 2
      %v279 = vadd.f32 %v277, %v278
      %v280 = vrot.slane %v279, 1
      %v281 = vadd.f32 %v279, %v280
      %s282 = vtos %v281
      %s283 = smul.f32 %s282, -0.5
      %v284 = vrcp.pop 2.0
      %s285 = vtos %v284
      %s286 = smul.f32 %s283, %s285
      %s287 = scalar_lea.smem [#allocation3], 0
      %288 = sst [smem:[%s287]] %s286
      %v289 = vmul.f32 %v265, 0.5
      %v290 = vmul.f32 %v289, 1.442695
      %v291 = vpow.pop %v290
      %v292 = vld [vmem:[%s6] sm:$0x3]
      %v293 = vmul.f32 %v291, %v292
      %v294 = vadd.f32 %v168, %v293
      %v295 = vld [vmem:[%s7] sm:$0xff]
      %v296 = vld [vmem:[%s7 + $0x8] sm:$0xff]
      %v297 = vld [vmem:[%s8] sm:$0x1]
      %v299 = vlaneseq
      %v300 = vshrl.u32 %v299, 7
      %v301 = vsub.s32 0, %v300
      %v302 = vrot.slane %v297, %v301
      %vm304 = vcmask 130048
      %v306 = vsel %vm304, %v294, 0
      %308 = vmatprep.subr.mxu0 0.0
      %309 = vmatpush1.msra.mxu0 0.0
      %310 = vmatprep.subr.mxu0 0.0
      %311 = vmatpush1.msra.mxu0 0.0
      %312 = vmatprep.subr.mxu0 0.0
      %313 = vmatpush1.msra.mxu0 0.0
      %314 = vmatprep.subr.mxu0 0.0
      %315 = vmatpush1.msra.mxu0 0.0
      %316 = vmatprep.subr.mxu0 0.0
      %317 = vmatpush1.msra.mxu0 0.0
      %318 = vmatprep.subr.mxu0 0.0
      %319 = vmatpush1.msra.mxu0 0.0
      %320 = vmatprep.subr.mxu0 0.0
      %321 = vmatpush1.msra.mxu0 0.0
      %322 = vmatprep.subr.mxu0 0.0
      %323 = vmatpush1.msra.mxu0 0.0
      %324 = vmatprep.subr.mxu0 0.0
      %325 = vmatpush1.msra.mxu0 0.0
      %326 = vmatprep.subr.mxu0 0.0
      %327 = vmatpush1.msra.mxu0 0.0
      %328 = vmatprep.subr.mxu0 0.0
      %329 = vmatpush1.msra.mxu0 0.0
      %330 = vmatprep.subr.mxu0 0.0
      %331 = vmatpush1.msra.mxu0 0.0
      %332 = vmatprep.subr.mxu0 0.0
      %333 = vmatpush1.msra.mxu0 0.0
      %334 = vmatprep.subr.mxu0 0.0
      %335 = vmatpush1.msra.mxu0 0.0
      %336 = vmatprep.subr.mxu0 0.0
      %337 = vmatpush1.msra.mxu0 %v296
      %338 = vmatprep.subr.mxu0 0.0
      %339 = vmatpush1.msra.mxu0 %v295
      %340 = vmatprep.subr.mxu0 0.0
      %341 = vmatpush2.msra.mxu0 0.0
      %342 = vmatprep.subr.mxu0 0.0
      %343 = vmatpush2.msra.mxu0 0.0
      %344 = vmatprep.subr.mxu0 0.0
      %345 = vmatpush2.msra.mxu0 0.0
      %346 = vmatprep.subr.mxu0 0.0
      %347 = vmatpush2.msra.mxu0 0.0
      %348 = vmatprep.subr.mxu0 0.0
      %349 = vmatpush2.msra.mxu0 0.0
      %350 = vmatprep.subr.mxu0 0.0
      %351 = vmatpush2.msra.mxu0 0.0
      %352 = vmatprep.subr.mxu0 0.0
      %353 = vmatpush2.msra.mxu0 0.0
      %354 = vmatprep.subr.mxu0 0.0
      %355 = vmatpush2.msra.mxu0 0.0
      %356 = vmatprep.subr.mxu0 0.0
      %357 = vmatpush2.msra.mxu0 0.0
      %358 = vmatprep.subr.mxu0 0.0
      %359 = vmatpush2.msra.mxu0 0.0
      %360 = vmatprep.subr.mxu0 0.0
      %361 = vmatpush2.msra.mxu0 0.0
      %362 = vmatprep.subr.mxu0 0.0
      %363 = vmatpush2.msra.mxu0 0.0
      %364 = vmatprep.subr.mxu0 0.0
      %365 = vmatpush2.msra.mxu0 0.0
      %366 = vmatprep.subr.mxu0 0.0
      %367 = vmatpush2.msra.mxu0 0.0
      %368 = vmatprep.subr.mxu0 0.0
      %369 = vmatpush2.msra.mxu0 0.0
      %370 = vmatprep.subr.mxu0 0.0
      %371 = vmatpush2.msra.mxu0 0.0
      %372 = vmatprep.mubr.f32.mxu0 0.0
      %373 = vmatmul.mubr.f32.gmra.mxu0 %v306
      %v374 = vpop.f32.mrf.mxu0
      %v375 = vadd.f32 %v302, %v374
      %v376 = vpop.f32.mrf.mxu0
      %377 = vdwg.mxu0
      %378 = vst [vmem:[%s9] sm:$0x3] %v375
    $region45: #{hier_vgnn_forward.6} parent=1 // pred_fallthru
      _
    // Predicated region
    $region46: #{hier_vgnn_forward.6} parent=1 // pred_check
      _
    $region47: #{hier_vgnn_forward.6} parent=1 // pred_check_branch
      %380 = sbr.rel (0) target = $region49
    $region48: #{hier_vgnn_forward.6} parent=1 // pred_region
      _
    $region49: #{hier_vgnn_forward.6} parent=1 // pred_fallthru
      _
    // Predicated region
    $region50: #{hier_vgnn_forward.6} parent=1 // pred_check
      _
    $region51: #{hier_vgnn_forward.6} parent=1 // pred_check_branch
      %382 = sbr.rel (0) target = $region53
    $region52: #{hier_vgnn_forward.6} parent=1 // pred_region
      %s384 = ssub.s32 16, 16
      %385 = vsyncadd [#allocation4], %s384
      %388 = dma.smem_to_hbm [#allocation3], 16, %s10, [#allocation4]
    $region53: #{hier_vgnn_forward.6} parent=1 // pred_fallthru
      _
    // Predicated region
    $region54: #{hier_vgnn_forward.6} parent=1 // pred_check
      _
    $region55: #{hier_vgnn_forward.6} parent=1 // pred_check_branch
      %390 = sbr.rel (0) target = $region57
    $region56: #{hier_vgnn_forward.6} parent=1 // pred_region
      _
    $region57: #{hier_vgnn_forward.6} parent=1 // pred_fallthru
      _
    // Predicated region
    $region58: #{hier_vgnn_forward.6} parent=1 // pred_check
      _
    $region59: #{hier_vgnn_forward.6} parent=1 // pred_check_branch
      %392 = sbr.rel (0) target = $region61
    $region60: #{hier_vgnn_forward.6} parent=1 // pred_region
      %393 = dma.done [#allocation4], 16
    $region61: #{hier_vgnn_forward.6} parent=1 // pred_fallthru
      _
    %394 = sfence
    %395 = vsyncpa [#allocation4], 1

</llo_original>
